<compile_context>
chip_gen: v7x
topology: tpu7x:2x2x1
jax: 0.10.0
libtpu: 0.0.40
codegen_flags: <defaults>
</compile_context>

<pallas_src>
import math

import jax
import jax.numpy as jnp
import numpy as np
from jax.experimental import pallas as pl
from jax.experimental.pallas import tpu as pltpu

# ---- small synthetic config (shape-consistent with the module's constraints:
#      n_heads % n_key_value_heads == 0, head_dim == n_embed // n_heads,
#      (n_embed // n_kv) // n_kv == head_dim  i.e. n_kv^2 == n_heads) ---------
B = 2                        # batch
T = 16                       # sequence length (<= block_size)
C = 256                      # n_embed
NH = 4                       # n_heads
NKV = 2                      # n_key_value_heads
HD = C // NH                 # 64   query head dim
CKV = C // NKV               # 128  w_k / w_v output dim
HDKV = CKV // NKV            # 64   kv head dim (== HD since NKV**2 == NH)
NREP = NH // NKV             # 2    GQA repeat factor
TH = T // NREP               # 8    compressed key length per query head
GD = NREP * HD               # 128  query columns per GQA group (lane aligned)
QKV_N = C + 2 * CKV          # 512  fused projection width
SCALE = 1.0 / math.sqrt(HD)

assert HDKV == HD, "module requires n_key_value_heads**2 == n_heads"
assert T % NREP == 0, "compressed-count trick assumes T % n_rep == 0"
assert C % 128 == 0 and GD % 128 == 0


# -----------------------------------------------------------------------------
# Fused kernel: one batch element per program.
#   x(T,C) bf16 --> [Wq*scale | Wk | Wv](C,512) -> q,k,v in VMEM (f32)
#   per-GQA-group, per-head causal attention reproducing the module's
#   repeat_kv semantics via causal multiplicity counts; 128-aligned head merge
#   -> c_proj -> out(T,C) f32.
# -----------------------------------------------------------------------------
def _mha_kernel(x_ref, wqkv_ref, wo_ref, o_ref):
    x = x_ref[0]                                   # (T, C) bf16

    # Fused Q/K/V projection: one wide MXU matmul, f32 accumulate.
    qkv = jnp.dot(x, wqkv_ref[...], preferred_element_type=jnp.float32)  # (T,512)
    q = qkv[:, :C]                 # pre-scaled by 1/sqrt(HD) via Wq
    k = qkv[:, C:C + CKV]
    v = qkv[:, C + CKV:]

    # Causal multiplicity matrix, shared across all heads / groups:
    # head r attends to kj row (r*TH + w) with multiplicity
    # cnt(s, w) = #{c in [0, NREP) : w*NREP + c <= s}.
    row = jax.lax.broadcasted_iota(jnp.int32, (T, TH), 0)   # query position s
    col = jax.lax.broadcasted_iota(jnp.int32, (T, TH), 1)   # compressed key idx w
    cnt = jnp.clip(row - col * NREP + 1, 0, NREP).astype(jnp.float32)
    valid = cnt > 0.0

    group_outs = []
    for j in range(NKV):                           # static unroll, NKV small
        qg = q[:, j * GD:(j + 1) * GD]             # (T, 128) lane-aligned slab
        kj = k[:, j * HD:(j + 1) * HD].astype(jnp.bfloat16)   # (T, HD)
        vj = v[:, j * HD:(j + 1) * HD].astype(jnp.bfloat16)   # (T, HD)

        head_outs = []
        for r in range(NREP):
            qh = qg[:, r * HD:(r + 1) * HD].astype(jnp.bfloat16)   # (T, HD)
            ks = kj[r * TH:(r + 1) * TH, :]                        # (TH, HD)
            vs = vj[r * TH:(r + 1) * TH, :]                        # (TH, HD)

            # contraction over last dims -> no explicit transpose of ks
            s = jax.lax.dot_general(
                qh, ks, dimension_numbers=(((1,), (1,)), ((), ())),
                preferred_element_type=jnp.float32)                # (T, TH)
            s = jnp.where(valid, s, -1e30)
            s = s - jnp.max(s, axis=-1, keepdims=True)
            p = cnt * jnp.exp(s)                   # multiplicity-weighted softmax
            p = p * pl.reciprocal(jnp.sum(p, axis=-1, keepdims=True), approx=True)

            head_outs.append(jnp.dot(p.astype(jnp.bfloat16), vs,
                                     preferred_element_type=jnp.float32))  # (T,HD)

        group_outs.append(jnp.concatenate(head_outs, axis=-1))     # (T, 128)

    y = jnp.concatenate(group_outs, axis=-1)       # (T, C): 128-aligned slabs
    o_ref[0] = jnp.dot(y.astype(jnp.bfloat16), wo_ref[...],
                       preferred_element_type=jnp.float32)


def mha_forward(x_b, wqkv, wo):
    """x_b: (B,T,C) bf16, wqkv: (C, C+2*CKV) bf16 (Wq pre-scaled), wo: (C,C) bf16."""
    flops = B * (2 * T * C * QKV_N            # fused QKV projection
                 + NH * 2 * (2 * T * TH * HD)  # scores + PV per head
                 + 2 * T * C * C)              # c_proj
    bytes_accessed = (B * T * C * 2            # x (bf16)
                      + C * QKV_N * 2          # wqkv (bf16)
                      + C * C * 2              # wo (bf16)
                      + B * T * C * 4)         # out (f32)
    transcendentals = B * NH * T * TH          # exp()

    return pl.pallas_call(
        _mha_kernel,
        out_shape=jax.ShapeDtypeStruct((B, T, C), jnp.float32),
        grid=(B,),
        in_specs=[
            pl.BlockSpec((1, T, C), lambda b: (b, 0, 0)),
            pl.BlockSpec((C, QKV_N), lambda b: (0, 0)),   # whole weight, constant
            pl.BlockSpec((C, C), lambda b: (0, 0)),
        ],
        out_specs=pl.BlockSpec((1, T, C), lambda b: (b, 0, 0)),
        compiler_params=pltpu.CompilerParams(
            dimension_semantics=("parallel",)),           # batch over v7x's 2 TCs
        cost_estimate=pl.CostEstimate(
            flops=flops, transcendentals=transcendentals,
            bytes_accessed=bytes_accessed),
    )(x_b, wqkv, wo)


# -----------------------------------------------------------------------------
# Plain-JAX f32 reference: literal transcription of the PyTorch module
# (including its exact repeat_kv expand-at-dim-3 + reshape), eval mode.
# -----------------------------------------------------------------------------
def reference(x, wq, wk, wv, wo):
    q = x @ wq                                                # (B,T,C)
    k = x @ wk                                                # (B,T,CKV)
    v = x @ wv
    qh = q.reshape(B, T, NH, HD).transpose(0, 2, 1, 3)        # (B, NH,  T, HD)
    kh = k.reshape(B, T, NKV, HDKV).transpose(0, 2, 1, 3)     # (B, NKV, T, HD)
    vh = v.reshape(B, T, NKV, HDKV).transpose(0, 2, 1, 3)

    # repeat_kv exactly as written in the module: expand at dim 3, then
    # reshape (B, n_kv, T, n_rep, hd) -> (B, n_kv*n_rep, T, hd)
    def rep(t):
        return jnp.broadcast_to(
            t[:, :, :, None, :], (B, NKV, T, NREP, HDKV)).reshape(B, NH, T, HDKV)
    kh, vh = rep(kh), rep(vh)

    s = jnp.einsum('bhtd,bhsd->bhts', qh, kh) * SCALE
    mask = jnp.tril(jnp.ones((T, T), dtype=bool))
    s = jnp.where(mask, s, -jnp.inf)
    p = jax.nn.softmax(s, axis=-1)
    y = jnp.einsum('bhts,bhsd->bhtd', p, vh)
    y = y.transpose(0, 2, 1, 3).reshape(B, T, C)
    return y @ wo                                  # resid_dropout: identity (eval)


if __name__ == "__main__":
    key = jax.random.PRNGKey(0)
    kx, k1, k2, k3, k4 = jax.random.split(key, 5)
    scale = 0.02
    x = jax.random.normal(kx, (B, T, C), jnp.float32)
    wq = jax.random.normal(k1, (C, C), jnp.float32) * scale
    wk = jax.random.normal(k2, (C, CKV), jnp.float32) * scale
    wv = jax.random.normal(k3, (C, CKV), jnp.float32) * scale
    wo = jax.random.normal(k4, (C, C), jnp.float32) * scale

    # Parameter prep: fold 1/sqrt(HD) into Wq, concatenate Q|K|V, cast to bf16.
    wqkv = jnp.concatenate([wq * SCALE, wk, wv], axis=1).astype(jnp.bfloat16)
    wo_b = wo.astype(jnp.bfloat16)
    x_b = x.astype(jnp.bfloat16)        # halve activation DMA into the kernel

    out = jax.jit(mha_forward)(x_b, wqkv, wo_b)
    out = jax.block_until_ready(out)

    ref = jax.block_until_ready(reference(x, wq, wk, wv, wo))
    assert out.shape == (B, T, C)
    # bf16 matmul operands + approx softmax reciprocal vs pure-f32 reference.
    np.testing.assert_allclose(np.asarray(out), np.asarray(ref),
                               atol=2e-2, rtol=2e-2)

    print("KERNEL_OK")
</pallas_src>

<mosaic_0001>
module attributes {stable_mosaic.version = 11 : i64} {
  func.func @_mha_kernel(%arg0: i32, %arg1: memref<1x16x256xbf16, #tpu.memory_space<vmem>>, %arg2: memref<256x512xbf16, #tpu.memory_space<vmem>>, %arg3: memref<256x256xbf16, #tpu.memory_space<vmem>>, %arg4: memref<1x16x256xf32, #tpu.memory_space<vmem>>) attributes {dimension_semantics = [#tpu.dimension_semantics<parallel>], iteration_bounds = array<i64: 2>, scalar_prefetch = 0 : i64, scratch_operands = 0 : i64, tpu.core_type = #tpu.core_type<tc>, window_params = [{transform_indices = @transform_0, window_bounds = array<i64: 1, 16, 256>}, {pipeline_mode = #tpu.pipeline_mode<synchronous>, transform_indices = @transform_1, window_bounds = array<i64: 256, 512>}, {pipeline_mode = #tpu.pipeline_mode<synchronous>, transform_indices = @transform_2, window_bounds = array<i64: 256, 256>}, {transform_indices = @transform_3, window_bounds = array<i64: 1, 16, 256>}]} {
    %c0 = arith.constant 0 : index
    %c0_0 = arith.constant 0 : index
    %c0_1 = arith.constant 0 : index
    %0 = vector.load %arg1[%c0, %c0_0, %c0_1] : memref<1x16x256xbf16, #tpu.memory_space<vmem>>, vector<1x16x256xbf16>
    %1 = vector.shape_cast %0 : vector<1x16x256xbf16> to vector<16x256xbf16>
    %c0_2 = arith.constant 0 : index
    %c0_3 = arith.constant 0 : index
    %2 = vector.load %arg2[%c0_2, %c0_3] : memref<256x512xbf16, #tpu.memory_space<vmem>>, vector<256x512xbf16>
    %cst = arith.constant dense<0.000000e+00> : vector<16x512xf32>
    %3 = tpu.matmul %1, %2, %cst {dimension_numbers = #tpu.dot_dimension_numbers<[1], [0], [0], [1], [0, 0, 1, 1], [], []>} : vector<16x256xbf16>, vector<256x512xbf16>, vector<16x512xf32> -> vector<16x512xf32>
    %4 = vector.extract_strided_slice %3 {offsets = [0, 0], sizes = [16, 256], strides = [1, 1]} : vector<16x512xf32> to vector<16x256xf32>
    %5 = vector.extract_strided_slice %3 {offsets = [0, 256], sizes = [16, 128], strides = [1, 1]} : vector<16x512xf32> to vector<16x128xf32>
    %6 = vector.extract_strided_slice %3 {offsets = [0, 384], sizes = [16, 128], strides = [1, 1]} : vector<16x512xf32> to vector<16x128xf32>
    %7 = tpu.iota {dimensions = array<i32: 0>} : vector<16x8xi32>
    %8 = tpu.iota {dimensions = array<i32: 1>} : vector<16x8xi32>
    %c2_i32 = arith.constant 2 : i32
    %9 = vector.broadcast %c2_i32 : i32 to vector<16x8xi32>
    %10 = arith.muli %8, %9 : vector<16x8xi32>
    %11 = arith.subi %7, %10 : vector<16x8xi32>
    %c1_i32 = arith.constant 1 : i32
    %12 = vector.broadcast %c1_i32 : i32 to vector<16x8xi32>
    %13 = arith.addi %11, %12 : vector<16x8xi32>
    %c0_i32 = arith.constant 0 : i32
    %c2_i32_4 = arith.constant 2 : i32
    %14 = vector.broadcast %c0_i32 : i32 to vector<16x8xi32>
    %15 = arith.maxsi %14, %13 : vector<16x8xi32>
    %16 = vector.broadcast %c2_i32_4 : i32 to vector<16x8xi32>
    %17 = arith.minsi %16, %15 : vector<16x8xi32>
    %18 = arith.sitofp %17 : vector<16x8xi32> to vector<16x8xf32>
    %cst_5 = arith.constant 0.000000e+00 : f32
    %19 = vector.broadcast %cst_5 : f32 to vector<16x8xf32>
    %20 = arith.cmpf ogt, %18, %19 : vector<16x8xf32>
    %21 = vector.extract_strided_slice %4 {offsets = [0, 0], sizes = [16, 128], strides = [1, 1]} : vector<16x256xf32> to vector<16x128xf32>
    %22 = vector.extract_strided_slice %5 {offsets = [0, 0], sizes = [16, 64], strides = [1, 1]} : vector<16x128xf32> to vector<16x64xf32>
    %23 = arith.truncf %22 : vector<16x64xf32> to vector<16x64xbf16>
    %24 = vector.extract_strided_slice %6 {offsets = [0, 0], sizes = [16, 64], strides = [1, 1]} : vector<16x128xf32> to vector<16x64xf32>
    %25 = arith.truncf %24 : vector<16x64xf32> to vector<16x64xbf16>
    %26 = vector.extract_strided_slice %21 {offsets = [0, 0], sizes = [16, 64], strides = [1, 1]} : vector<16x128xf32> to vector<16x64xf32>
    %27 = arith.truncf %26 : vector<16x64xf32> to vector<16x64xbf16>
    %28 = vector.extract_strided_slice %23 {offsets = [0, 0], sizes = [8, 64], strides = [1, 1]} : vector<16x64xbf16> to vector<8x64xbf16>
    %29 = vector.extract_strided_slice %25 {offsets = [0, 0], sizes = [8, 64], strides = [1, 1]} : vector<16x64xbf16> to vector<8x64xbf16>
    %cst_6 = arith.constant dense<0.000000e+00> : vector<16x8xf32>
    %30 = tpu.matmul %27, %28, %cst_6 {dimension_numbers = #tpu.dot_dimension_numbers<[1], [1], [0], [0], [0, 0, 1, 0], [], []>} : vector<16x64xbf16>, vector<8x64xbf16>, vector<16x8xf32> -> vector<16x8xf32>
    %cst_7 = arith.constant -1.000000e+30 : f32
    %31 = vector.broadcast %cst_7 : f32 to vector<16x8xf32>
    %32 = arith.select %20, %30, %31 : vector<16x8xi1>, vector<16x8xf32>
    %cst_8 = arith.constant dense<0xFF800000> : vector<16xf32>
    %33 = vector.multi_reduction <maximumf>, %32, %cst_8 [1] : vector<16x8xf32> to vector<16xf32>
    %34 = vector.shape_cast %33 : vector<16xf32> to vector<16x1xf32>
    %35 = vector.broadcast %34 : vector<16x1xf32> to vector<16x8xf32>
    %36 = arith.subf %32, %35 : vector<16x8xf32>
    %37 = math.exp %36 : vector<16x8xf32>
    %38 = arith.mulf %18, %37 : vector<16x8xf32>
    %cst_9 = arith.constant dense<0.000000e+00> : vector<16xf32>
    %39 = vector.multi_reduction <add>, %38, %cst_9 [1] : vector<16x8xf32> to vector<16xf32>
    %40 = vector.shape_cast %39 : vector<16xf32> to vector<16x1xf32>
    %41 = tpu.reciprocal %40 {approx = true} : vector<16x1xf32> -> vector<16x1xf32>
    %42 = vector.broadcast %41 : vector<16x1xf32> to vector<16x8xf32>
    %43 = arith.mulf %38, %42 : vector<16x8xf32>
    %44 = arith.truncf %43 : vector<16x8xf32> to vector<16x8xbf16>
    %cst_10 = arith.constant dense<0.000000e+00> : vector<16x64xf32>
    %45 = tpu.matmul %44, %29, %cst_10 {dimension_numbers = #tpu.dot_dimension_numbers<[1], [0], [0], [1], [0, 0, 1, 1], [], []>} : vector<16x8xbf16>, vector<8x64xbf16>, vector<16x64xf32> -> vector<16x64xf32>
    %46 = vector.extract_strided_slice %21 {offsets = [0, 64], sizes = [16, 64], strides = [1, 1]} : vector<16x128xf32> to vector<16x64xf32>
    %47 = arith.truncf %46 : vector<16x64xf32> to vector<16x64xbf16>
    %48 = vector.extract_strided_slice %23 {offsets = [8, 0], sizes = [8, 64], strides = [1, 1]} : vector<16x64xbf16> to vector<8x64xbf16>
    %49 = vector.extract_strided_slice %25 {offsets = [8, 0], sizes = [8, 64], strides = [1, 1]} : vector<16x64xbf16> to vector<8x64xbf16>
    %cst_11 = arith.constant dense<0.000000e+00> : vector<16x8xf32>
    %50 = tpu.matmul %47, %48, %cst_11 {dimension_numbers = #tpu.dot_dimension_numbers<[1], [1], [0], [0], [0, 0, 1, 0], [], []>} : vector<16x64xbf16>, vector<8x64xbf16>, vector<16x8xf32> -> vector<16x8xf32>
    %cst_12 = arith.constant -1.000000e+30 : f32
    %51 = vector.broadcast %cst_12 : f32 to vector<16x8xf32>
    %52 = arith.select %20, %50, %51 : vector<16x8xi1>, vector<16x8xf32>
    %cst_13 = arith.constant dense<0xFF800000> : vector<16xf32>
    %53 = vector.multi_reduction <maximumf>, %52, %cst_13 [1] : vector<16x8xf32> to vector<16xf32>
    %54 = vector.shape_cast %53 : vector<16xf32> to vector<16x1xf32>
    %55 = vector.broadcast %54 : vector<16x1xf32> to vector<16x8xf32>
    %56 = arith.subf %52, %55 : vector<16x8xf32>
    %57 = math.exp %56 : vector<16x8xf32>
    %58 = arith.mulf %18, %57 : vector<16x8xf32>
    %cst_14 = arith.constant dense<0.000000e+00> : vector<16xf32>
    %59 = vector.multi_reduction <add>, %58, %cst_14 [1] : vector<16x8xf32> to vector<16xf32>
    %60 = vector.shape_cast %59 : vector<16xf32> to vector<16x1xf32>
    %61 = tpu.reciprocal %60 {approx = true} : vector<16x1xf32> -> vector<16x1xf32>
    %62 = vector.broadcast %61 : vector<16x1xf32> to vector<16x8xf32>
    %63 = arith.mulf %58, %62 : vector<16x8xf32>
    %64 = arith.truncf %63 : vector<16x8xf32> to vector<16x8xbf16>
    %cst_15 = arith.constant dense<0.000000e+00> : vector<16x64xf32>
    %65 = tpu.matmul %64, %49, %cst_15 {dimension_numbers = #tpu.dot_dimension_numbers<[1], [0], [0], [1], [0, 0, 1, 1], [], []>} : vector<16x8xbf16>, vector<8x64xbf16>, vector<16x64xf32> -> vector<16x64xf32>
    %66 = tpu.concatenate %45, %65 in 1 : vector<16x64xf32>, vector<16x64xf32> -> vector<16x128xf32>
    %67 = vector.extract_strided_slice %4 {offsets = [0, 128], sizes = [16, 128], strides = [1, 1]} : vector<16x256xf32> to vector<16x128xf32>
    %68 = vector.extract_strided_slice %5 {offsets = [0, 64], sizes = [16, 64], strides = [1, 1]} : vector<16x128xf32> to vector<16x64xf32>
    %69 = arith.truncf %68 : vector<16x64xf32> to vector<16x64xbf16>
    %70 = vector.extract_strided_slice %6 {offsets = [0, 64], sizes = [16, 64], strides = [1, 1]} : vector<16x128xf32> to vector<16x64xf32>
    %71 = arith.truncf %70 : vector<16x64xf32> to vector<16x64xbf16>
    %72 = vector.extract_strided_slice %67 {offsets = [0, 0], sizes = [16, 64], strides = [1, 1]} : vector<16x128xf32> to vector<16x64xf32>
    %73 = arith.truncf %72 : vector<16x64xf32> to vector<16x64xbf16>
    %74 = vector.extract_strided_slice %69 {offsets = [0, 0], sizes = [8, 64], strides = [1, 1]} : vector<16x64xbf16> to vector<8x64xbf16>
    %75 = vector.extract_strided_slice %71 {offsets = [0, 0], sizes = [8, 64], strides = [1, 1]} : vector<16x64xbf16> to vector<8x64xbf16>
    %cst_16 = arith.constant dense<0.000000e+00> : vector<16x8xf32>
    %76 = tpu.matmul %73, %74, %cst_16 {dimension_numbers = #tpu.dot_dimension_numbers<[1], [1], [0], [0], [0, 0, 1, 0], [], []>} : vector<16x64xbf16>, vector<8x64xbf16>, vector<16x8xf32> -> vector<16x8xf32>
    %cst_17 = arith.constant -1.000000e+30 : f32
    %77 = vector.broadcast %cst_17 : f32 to vector<16x8xf32>
    %78 = arith.select %20, %76, %77 : vector<16x8xi1>, vector<16x8xf32>
    %cst_18 = arith.constant dense<0xFF800000> : vector<16xf32>
    %79 = vector.multi_reduction <maximumf>, %78, %cst_18 [1] : vector<16x8xf32> to vector<16xf32>
    %80 = vector.shape_cast %79 : vector<16xf32> to vector<16x1xf32>
    %81 = vector.broadcast %80 : vector<16x1xf32> to vector<16x8xf32>
    %82 = arith.subf %78, %81 : vector<16x8xf32>
    %83 = math.exp %82 : vector<16x8xf32>
    %84 = arith.mulf %18, %83 : vector<16x8xf32>
    %cst_19 = arith.constant dense<0.000000e+00> : vector<16xf32>
    %85 = vector.multi_reduction <add>, %84, %cst_19 [1] : vector<16x8xf32> to vector<16xf32>
    %86 = vector.shape_cast %85 : vector<16xf32> to vector<16x1xf32>
    %87 = tpu.reciprocal %86 {approx = true} : vector<16x1xf32> -> vector<16x1xf32>
    %88 = vector.broadcast %87 : vector<16x1xf32> to vector<16x8xf32>
    %89 = arith.mulf %84, %88 : vector<16x8xf32>
    %90 = arith.truncf %89 : vector<16x8xf32> to vector<16x8xbf16>
    %cst_20 = arith.constant dense<0.000000e+00> : vector<16x64xf32>
    %91 = tpu.matmul %90, %75, %cst_20 {dimension_numbers = #tpu.dot_dimension_numbers<[1], [0], [0], [1], [0, 0, 1, 1], [], []>} : vector<16x8xbf16>, vector<8x64xbf16>, vector<16x64xf32> -> vector<16x64xf32>
    %92 = vector.extract_strided_slice %67 {offsets = [0, 64], sizes = [16, 64], strides = [1, 1]} : vector<16x128xf32> to vector<16x64xf32>
    %93 = arith.truncf %92 : vector<16x64xf32> to vector<16x64xbf16>
    %94 = vector.extract_strided_slice %69 {offsets = [8, 0], sizes = [8, 64], strides = [1, 1]} : vector<16x64xbf16> to vector<8x64xbf16>
    %95 = vector.extract_strided_slice %71 {offsets = [8, 0], sizes = [8, 64], strides = [1, 1]} : vector<16x64xbf16> to vector<8x64xbf16>
    %cst_21 = arith.constant dense<0.000000e+00> : vector<16x8xf32>
    %96 = tpu.matmul %93, %94, %cst_21 {dimension_numbers = #tpu.dot_dimension_numbers<[1], [1], [0], [0], [0, 0, 1, 0], [], []>} : vector<16x64xbf16>, vector<8x64xbf16>, vector<16x8xf32> -> vector<16x8xf32>
    %cst_22 = arith.constant -1.000000e+30 : f32
    %97 = vector.broadcast %cst_22 : f32 to vector<16x8xf32>
    %98 = arith.select %20, %96, %97 : vector<16x8xi1>, vector<16x8xf32>
    %cst_23 = arith.constant dense<0xFF800000> : vector<16xf32>
    %99 = vector.multi_reduction <maximumf>, %98, %cst_23 [1] : vector<16x8xf32> to vector<16xf32>
    %100 = vector.shape_cast %99 : vector<16xf32> to vector<16x1xf32>
    %101 = vector.broadcast %100 : vector<16x1xf32> to vector<16x8xf32>
    %102 = arith.subf %98, %101 : vector<16x8xf32>
    %103 = math.exp %102 : vector<16x8xf32>
    %104 = arith.mulf %18, %103 : vector<16x8xf32>
    %cst_24 = arith.constant dense<0.000000e+00> : vector<16xf32>
    %105 = vector.multi_reduction <add>, %104, %cst_24 [1] : vector<16x8xf32> to vector<16xf32>
    %106 = vector.shape_cast %105 : vector<16xf32> to vector<16x1xf32>
    %107 = tpu.reciprocal %106 {approx = true} : vector<16x1xf32> -> vector<16x1xf32>
    %108 = vector.broadcast %107 : vector<16x1xf32> to vector<16x8xf32>
    %109 = arith.mulf %104, %108 : vector<16x8xf32>
    %110 = arith.truncf %109 : vector<16x8xf32> to vector<16x8xbf16>
    %cst_25 = arith.constant dense<0.000000e+00> : vector<16x64xf32>
    %111 = tpu.matmul %110, %95, %cst_25 {dimension_numbers = #tpu.dot_dimension_numbers<[1], [0], [0], [1], [0, 0, 1, 1], [], []>} : vector<16x8xbf16>, vector<8x64xbf16>, vector<16x64xf32> -> vector<16x64xf32>
    %112 = tpu.concatenate %91, %111 in 1 : vector<16x64xf32>, vector<16x64xf32> -> vector<16x128xf32>
    %113 = tpu.concatenate %66, %112 in 1 : vector<16x128xf32>, vector<16x128xf32> -> vector<16x256xf32>
    %114 = arith.truncf %113 : vector<16x256xf32> to vector<16x256xbf16>
    %c0_26 = arith.constant 0 : index
    %c0_27 = arith.constant 0 : index
    %115 = vector.load %arg3[%c0_26, %c0_27] : memref<256x256xbf16, #tpu.memory_space<vmem>>, vector<256x256xbf16>
    %cst_28 = arith.constant dense<0.000000e+00> : vector<16x256xf32>
    %116 = tpu.matmul %114, %115, %cst_28 {dimension_numbers = #tpu.dot_dimension_numbers<[1], [0], [0], [1], [0, 0, 1, 1], [], []>} : vector<16x256xbf16>, vector<256x256xbf16>, vector<16x256xf32> -> vector<16x256xf32>
    %c0_29 = arith.constant 0 : index
    %c0_30 = arith.constant 0 : index
    %c0_31 = arith.constant 0 : index
    %117 = vector.load %arg4[%c0_29, %c0_30, %c0_31] : memref<1x16x256xf32, #tpu.memory_space<vmem>>, vector<1x16x256xf32>
    %118 = vector.shape_cast %117 : vector<1x16x256xf32> to vector<16x256xf32>
    %119 = vector.shape_cast %116 : vector<16x256xf32> to vector<1x16x256xf32>
    tpu.vector_store %arg4[%c0_29, %c0_30, %c0_31], %119 {strides = array<i32>} : memref<1x16x256xf32, #tpu.memory_space<vmem>>, vector<1x16x256xf32>,
    return
  }
  func.func @transform_0(%arg0: i32) -> (i32, i32, i32) {
    %c0_i32 = arith.constant 0 : i32
    %c0_i32_0 = arith.constant 0 : i32
    %c0_i32_1 = arith.constant 0 : i32
    return %arg0, %c0_i32, %c0_i32_0 : i32, i32, i32
  }
  func.func @transform_1(%arg0: i32) -> (i32, i32) {
    %c0_i32 = arith.constant 0 : i32
    %c0_i32_0 = arith.constant 0 : i32
    %c0_i32_1 = arith.constant 0 : i32
    return %c0_i32, %c0_i32_0 : i32, i32
  }
  func.func @transform_2(%arg0: i32) -> (i32, i32) {
    %c0_i32 = arith.constant 0 : i32
    %c0_i32_0 = arith.constant 0 : i32
    %c0_i32_1 = arith.constant 0 : i32
    return %c0_i32, %c0_i32_0 : i32, i32
  }
  func.func @transform_3(%arg0: i32) -> (i32, i32, i32) {
    %c0_i32 = arith.constant 0 : i32
    %c0_i32_0 = arith.constant 0 : i32
    %c0_i32_1 = arith.constant 0 : i32
    return %arg0, %c0_i32, %c0_i32_0 : i32, i32, i32
  }
}

</mosaic_0001>

<llo_original>
// kernel: mha_forward.1
$region0: #{mha_forward.1}
  #allocation0 [shape = 'u32[]', space=smem, size = 0x4, offset = 0x4, fixed_abs, tag = 'smem constant byte address 0x4 - core index']
  #allocation1 [shape = 'u32[144,128]{1,0:T(1,128)}', space=vmem, size = 0x12000, scoped, tag = 'internal scratch']
  %s0 = inlined_call_operand.hbm [shape: bf16[2,16,256], index: 0, kind: input, shape index: {}]
  %s1 = inlined_call_operand.hbm [shape: bf16[256,512], index: 1, kind: input, shape index: {}]
  %s2 = inlined_call_operand.hbm [shape: bf16[256,256], index: 2, kind: input, shape index: {}]
  %s3 = inlined_call_operand.hbm [shape: f32[2,16,256], index: 3, kind: output, shape index: {}]
  %s4 = sld [smem:[#allocation0]]
  $region57: #{mha_forward.1} parent=0
    _
  %s6 = ssub.s32 1, %s4
  %s7 = scalar_select 0, %s6, %s4
  $region1: #{mha_forward.1} parent=0
    #allocation2 [shape = 'u8[16384]{0}', space=vmem, size = 0x4000, scoped, tag = 'input window, operand 0']
    #allocation3 [shape = 's32[2]{0}', space=sflag, size = 0x8, scoped, tag = 'scoped memory for mha_forward.1']
    #allocation4 [shape = 's32[2]{0}', space=sflag, size = 0x8, scoped, tag = 'scoped memory for mha_forward.1']
    #allocation5 [shape = 'u8[262144]{0}', space=vmem, size = 0x40000, scoped, tag = 'input window, operand 1, single buffered']
    #allocation6 [shape = 's32[1]{0}', space=sflag, size = 0x4, scoped, tag = 'scoped memory for mha_forward.1']
    #allocation7 [shape = 'u8[131072]{0}', space=vmem, size = 0x20000, scoped, tag = 'input window, operand 2, single buffered']
    #allocation8 [shape = 'u8[32768]{0}', space=vmem, size = 0x8000, scoped, tag = 'output window, operand 0']
    %8 = vsyncpa [#allocation3], 0
    %s9 = scalar_lea.sflag [#allocation3], 1
    %10 = vsyncpa %s9, 0
    %11 = vsyncpa [#allocation6], 0
    %12 = vsyncpa [#allocation4], 0
    %s13 = scalar_lea.sflag [#allocation4], 1
    %14 = vsyncpa %s13, 0
    loop: start=0, step=1, limit=4
    $region2: #{mha_forward.1} parent=1 // loop_pre_header
      _
    $region3: #{mha_forward.1} parent=1 // loop_header
      %s16 = sphi 0, %s20
      %p17 = scmp.ge.s32.totalorder %s16, 4
      %s26 = sphi 0, %s28
      %s29 = sphi 0, %s26
      %s30 = sphi 0, %s29
      %s46 = sphi 0, %s30
      %s50 = sphi 0, %s50
      %s52 = sphi 0, %s50
      %s53 = sphi 0, %s52
      %s67 = sphi 0, %s53
      %s71 = sphi 0, %s71
      %s73 = sphi 0, %s71
      %s74 = sphi 0, %s73
      %s88 = sphi 0, %s74
      %s94 = sphi 0, %s96
      %s97 = sphi 0, %s94
      %s98 = sphi 0, %s97
      %s114 = sphi 0, %s98
    $region4: #{mha_forward.1} parent=1 // loop_header_branch
      %19 = sbr.rel (%p17) target = $region8
    $region5: #{mha_forward.1} parent=1 // loop_body
      %s21 = ssub.s32 %s16, 1
      %s22 = ssub.s32 %s16, 2
      %s23 = sadd.s32 %s16, 1
      %s24 = ssub.s32 %s16, %s23
      %p25 = scmp.eq.s32.totalorder %s24, 0
      %s27 = sadd.s32 %s26, 1
      %s28 = scalar_select %p25, %s26, %s27
      %p31 = pneg %p25
      %p32 = scmp.eq.s32.totalorder %s16, 1
      %p33 = por %p31, %p32
      %p34 = scmp.ne.s32.totalorder %s26, %s29
      %p35 = scmp.eq.s32.totalorder %s16, 0
      %p36 = por %p34, %p35
      %p37 = scmp.ne.s32.totalorder %s26, %s29
      %p38 = scmp.eq.s32.totalorder %s21, 1
      %p39 = por %p37, %p38
      %p40 = scmp.ne.s32.totalorder %s29, %s30
      %p41 = scmp.eq.s32.totalorder %s21, 0
      %p42 = por %p40, %p41
      %p43 = scmp.ne.s32.totalorder %s29, %s30
      %p44 = scmp.eq.s32.totalorder %s22, 1
      %p45 = por %p43, %p44
      %p47 = scmp.ne.s32.totalorder %s30, %s46
      %p48 = scmp.eq.s32.totalorder %s22, 0
      %p49 = por %p47, %p48
      %s51 = sadd.s32 %s50, 1
      %p54 = scmp.eq.s32.totalorder %s16, 1
      %p55 = scmp.ne.s32.totalorder %s50, %s52
      %p56 = scmp.eq.s32.totalorder %s16, 0
      %p57 = por %p55, %p56
      %p58 = scmp.ne.s32.totalorder %s50, %s52
      %p59 = scmp.eq.s32.totalorder %s21, 1
      %p60 = por %p58, %p59
      %p61 = scmp.ne.s32.totalorder %s52, %s53
      %p62 = scmp.eq.s32.totalorder %s21, 0
      %p63 = por %p61, %p62
      %p64 = scmp.ne.s32.totalorder %s52, %s53
      %p65 = scmp.eq.s32.totalorder %s22, 1
      %p66 = por %p64, %p65
      %p68 = scmp.ne.s32.totalorder %s53, %s67
      %p69 = scmp.eq.s32.totalorder %s22, 0
      %p70 = por %p68, %p69
      %s72 = sadd.s32 %s71, 1
      %p75 = scmp.eq.s32.totalorder %s16, 1
      %p76 = scmp.ne.s32.totalorder %s71, %s73
      %p77 = scmp.eq.s32.totalorder %s16, 0
      %p78 = por %p76, %p77
      %p79 = scmp.ne.s32.totalorder %s71, %s73
      %p80 = scmp.eq.s32.totalorder %s21, 1
      %p81 = por %p79, %p80
      %p82 = scmp.ne.s32.totalorder %s73, %s74
      %p83 = scmp.eq.s32.totalorder %s21, 0
      %p84 = por %p82, %p83
      %p85 = scmp.ne.s32.totalorder %s73, %s74
      %p86 = scmp.eq.s32.totalorder %s22, 1
      %p87 = por %p85, %p86
      %p89 = scmp.ne.s32.totalorder %s74, %s88
      %p90 = scmp.eq.s32.totalorder %s22, 0
      %p91 = por %p89, %p90
      %s92 = ssub.s32 %s16, %s23
      %p93 = scmp.eq.s32.totalorder %s92, 0
      %s95 = sadd.s32 %s94, 1
      %s96 = scalar_select %p93, %s94, %s95
      %p99 = pneg %p93
      %p100 = scmp.eq.s32.totalorder %s16, 1
      %p101 = por %p99, %p100
      %p102 = scmp.ne.s32.totalorder %s94, %s97
      %p103 = scmp.eq.s32.totalorder %s16, 0
      %p104 = por %p102, %p103
      %p105 = scmp.ne.s32.totalorder %s94, %s97
      %p106 = scmp.eq.s32.totalorder %s21, 1
      %p107 = por %p105, %p106
      %p108 = scmp.ne.s32.totalorder %s97, %s98
      %p109 = scmp.eq.s32.totalorder %s21, 0
      %p110 = por %p108, %p109
      %p111 = scmp.ne.s32.totalorder %s97, %s98
      %p112 = scmp.eq.s32.totalorder %s22, 1
      %p113 = por %p111, %p112
      %p115 = scmp.ne.s32.totalorder %s98, %s114
      %p116 = scmp.eq.s32.totalorder %s22, 0
      %p117 = por %p115, %p116
      %p118 = scmp.le.s32.totalorder 1, %s16
      %p119 = scmp.lt.s32.totalorder %s16, 3
      %p120 = pnand %p118, %p119
      %p121 = pneg %p120
      // Predicated region
      $region9: #{mha_forward.1} parent=5 // pred_check
        _
      $region10: #{mha_forward.1} parent=5 // pred_check_branch
        %123 = sbr.rel (%p120) target = $region12
      $region11: #{mha_forward.1} parent=5 // pred_region
        %s124 = ssub.s32 %s16, 1
        // Predicated region
        $region13: #{mha_forward.1} parent=11 // pred_check
          %p125 = pneg %p63
        $region14: #{mha_forward.1} parent=11 // pred_check_branch
          %127 = sbr.rel (%p125) target = $region16
        $region15: #{mha_forward.1} parent=11 // pred_region
          %s129 = ssub.s32 8192, 8192
          %130 = vsyncadd [#allocation6], %s129
          %s131 = sshll.u32 [#allocation5], 4
          %s132 = int_to_ptr.vmem [resolvable:$true] %s131
          %137 = dma.hbm_to_vmem [thread:$0]  %s1, 8192, %s132, [#allocation6], 256, 256, 16
        $region16: #{mha_forward.1} parent=11 // pred_fallthru
          _
        // Predicated region
        $region17: #{mha_forward.1} parent=11 // pred_check
          %p138 = pneg %p84
        $region18: #{mha_forward.1} parent=11 // pred_check_branch
          %140 = sbr.rel (%p138) target = $region20
        $region19: #{mha_forward.1} parent=11 // pred_region
          %s142 = ssub.s32 4096, 4096
          %143 = vsyncadd [#allocation6], %s142
          %s144 = sshll.u32 [#allocation7], 4
          %s145 = int_to_ptr.vmem [resolvable:$true] %s144
          %150 = dma.hbm_to_vmem [thread:$0]  %s2, 4096, %s145, [#allocation6], 128, 128, 8
        $region20: #{mha_forward.1} parent=11 // pred_fallthru
          _
      $region12: #{mha_forward.1} parent=5 // pred_fallthru
        _
      %p151 = scmp.lt.s32.totalorder %s16, 2
      // Predicated region
      $region21: #{mha_forward.1} parent=5 // pred_check
        %p152 = pneg %p151
      $region22: #{mha_forward.1} parent=5 // pred_check_branch
        %154 = sbr.rel (%p152) target = $region24
      $region23: #{mha_forward.1} parent=5 // pred_region
        // Predicated region
        $region25: #{mha_forward.1} parent=23 // pred_check
          %p155 = pneg %p36
        $region26: #{mha_forward.1} parent=23 // pred_check_branch
          %157 = sbr.rel (%p155) target = $region28
        $region27: #{mha_forward.1} parent=23 // pred_region
          %s158 = sand.u32 %s26, 1
          %s159 = scalar_lea.sflag [#allocation3], %s158
          %s160 = sand.u32 %s26, 1
          %s161 = smul.addr %s160, 16
          %s162 = scalar_lea.vmem [#allocation2], %s161
          %s164 = ssub.s32 256, 256
          %165 = vsyncadd %s159, %s164
          %s166 = smul.addr %s16, 4
          %s167 = smul.addr %s166, 64
          %s168 = scalar_lea.hbm %s0, %s167
          %s169 = sshll.u32 %s162, 4
          %s170 = int_to_ptr.vmem [resolvable:$true] %s169
          %175 = dma.hbm_to_vmem [thread:$0]  %s168, 256, %s170, %s159, 128, 128, 8
        $region28: #{mha_forward.1} parent=23 // pred_fallthru
          _
      $region24: #{mha_forward.1} parent=5 // pred_fallthru
        _
      %p176 = scmp.le.s32.totalorder 1, %s16
      %p177 = scmp.lt.s32.totalorder %s16, 3
      %p178 = pnand %p176, %p177
      %p179 = pneg %p178
      // Predicated region
      $region29: #{mha_forward.1} parent=5 // pred_check
        _
      $region30: #{mha_forward.1} parent=5 // pred_check_branch
        %181 = sbr.rel (%p178) target = $region32
      $region31: #{mha_forward.1} parent=5 // pred_region
        %s182 = ssub.s32 %s16, 1
        %s183 = sand.u32 %s29, 1
        %s184 = scalar_lea.sflag [#allocation3], %s183
        %s185 = sand.u32 %s29, 1
        %s186 = smul.addr %s185, 16
        %s187 = scalar_lea.vmem [#allocation2], %s186
        // Predicated region
        $region33: #{mha_forward.1} parent=31 // pred_check
          %p188 = pneg %p42
        $region34: #{mha_forward.1} parent=31 // pred_check_branch
          %190 = sbr.rel (%p188) target = $region36
        $region35: #{mha_forward.1} parent=31 // pred_region
          %191 = dma.done %s184, 256
        $region36: #{mha_forward.1} parent=31 // pred_fallthru
          _
        // Predicated region
        $region37: #{mha_forward.1} parent=31 // pred_check
          %p192 = pneg %p63
        $region38: #{mha_forward.1} parent=31 // pred_check_branch
          %194 = sbr.rel (%p192) target = $region40
        $region39: #{mha_forward.1} parent=31 // pred_region
          %195 = dma.done [#allocation6], 8192
        $region40: #{mha_forward.1} parent=31 // pred_fallthru
          _
        // Predicated region
        $region41: #{mha_forward.1} parent=31 // pred_check
          %p196 = pneg %p84
        $region42: #{mha_forward.1} parent=31 // pred_check_branch
          %198 = sbr.rel (%p196) target = $region44
        $region43: #{mha_forward.1} parent=31 // pred_region
          %199 = dma.done [#allocation6], 4096
        $region44: #{mha_forward.1} parent=31 // pred_fallthru
          _
        %s200 = sand.u32 %s29, 1
        %s201 = scalar_lea.sflag [#allocation3], %s200
        %s202 = sand.u32 %s29, 1
        %s203 = smul.addr %s202, 16
        %s204 = scalar_lea.vmem [#allocation2], %s203
        %p205 = pneg %p42
        %p206 = pneg %p39
        %p207 = pneg %p63
        %p208 = pneg %p60
        %p209 = pneg %p84
        %p210 = pneg %p81
        %p211 = pneg %p110
        %p212 = pneg %p107
        %s213 = sand.u32 %s97, 1
        %s214 = scalar_lea.sflag [#allocation4], %s213
        %s215 = sand.u32 %s97, 1
        %s216 = smul.addr %s215, 32
        %s217 = scalar_lea.vmem [#allocation8], %s216
        %v219 = vld [vmem:[%s187] sm:$0xff]
        %v220 = vld [vmem:[%s187 + $0x8] sm:$0xff]
        %v221 = vld [vmem:[#allocation5] sm:$0xff]
        %v222 = vld [vmem:[#allocation5 + $0x8] sm:$0xff]
        %v223 = vld [vmem:[#allocation5 + $0x10] sm:$0xff]
        %v224 = vld [vmem:[#allocation5 + $0x18] sm:$0xff]
        %v225 = vld [vmem:[#allocation5 + $0x20] sm:$0xff]
        %v226 = vld [vmem:[#allocation5 + $0x28] sm:$0xff]
        %v227 = vld [vmem:[#allocation5 + $0x30] sm:$0xff]
        %v228 = vld [vmem:[#allocation5 + $0x38] sm:$0xff]
        %v229 = vld [vmem:[#allocation5 + $0x40] sm:$0xff]
        %v230 = vld [vmem:[#allocation5 + $0x48] sm:$0xff]
        %v231 = vld [vmem:[#allocation5 + $0x50] sm:$0xff]
        %v232 = vld [vmem:[#allocation5 + $0x58] sm:$0xff]
        %v233 = vld [vmem:[#allocation5 + $0x60] sm:$0xff]
        %v234 = vld [vmem:[#allocation5 + $0x68] sm:$0xff]
        %v235 = vld [vmem:[#allocation5 + $0x70] sm:$0xff]
        %v236 = vld [vmem:[#allocation5 + $0x78] sm:$0xff]
        %v237 = vld [vmem:[#allocation5 + $0x80] sm:$0xff]
        %v238 = vld [vmem:[#allocation5 + $0x88] sm:$0xff]
        %v239 = vld [vmem:[#allocation5 + $0x90] sm:$0xff]
        %v240 = vld [vmem:[#allocation5 + $0x98] sm:$0xff]
        %v241 = vld [vmem:[#allocation5 + $0xa0] sm:$0xff]
        %v242 = vld [vmem:[#allocation5 + $0xa8] sm:$0xff]
        %v243 = vld [vmem:[#allocation5 + $0xb0] sm:$0xff]
        %v244 = vld [vmem:[#allocation5 + $0xb8] sm:$0xff]
        %v245 = vld [vmem:[#allocation5 + $0xc0] sm:$0xff]
        %v246 = vld [vmem:[#allocation5 + $0xc8] sm:$0xff]
        %v247 = vld [vmem:[#allocation5 + $0xd0] sm:$0xff]
        %v248 = vld [vmem:[#allocation5 + $0xd8] sm:$0xff]
        %v249 = vld [vmem:[#allocation5 + $0xe0] sm:$0xff]
        %v250 = vld [vmem:[#allocation5 + $0xe8] sm:$0xff]
        %v251 = vld [vmem:[#allocation5 + $0xf0] sm:$0xff]
        %v252 = vld [vmem:[#allocation5 + $0xf8] sm:$0xff]
        %v253 = vld [vmem:[#allocation5 + $0x100] sm:$0xff]
        %v254 = vld [vmem:[#allocation5 + $0x108] sm:$0xff]
        %v255 = vld [vmem:[#allocation5 + $0x110] sm:$0xff]
        %v256 = vld [vmem:[#allocation5 + $0x118] sm:$0xff]
        %v257 = vld [vmem:[#allocation5 + $0x120] sm:$0xff]
        %v258 = vld [vmem:[#allocation5 + $0x128] sm:$0xff]
        %v259 = vld [vmem:[#allocation5 + $0x130] sm:$0xff]
        %v260 = vld [vmem:[#allocation5 + $0x138] sm:$0xff]
        %v261 = vld [vmem:[#allocation5 + $0x140] sm:$0xff]
        %v262 = vld [vmem:[#allocation5 + $0x148] sm:$0xff]
        %v263 = vld [vmem:[#allocation5 + $0x150] sm:$0xff]
        %v264 = vld [vmem:[#allocation5 + $0x158] sm:$0xff]
        %v265 = vld [vmem:[#allocation5 + $0x160] sm:$0xff]
        %v266 = vld [vmem:[#allocation5 + $0x168] sm:$0xff]
        %v267 = vld [vmem:[#allocation5 + $0x170] sm:$0xff]
        %v268 = vld [vmem:[#allocation5 + $0x178] sm:$0xff]
        %v269 = vld [vmem:[#allocation5 + $0x180] sm:$0xff]
        %v270 = vld [vmem:[#allocation5 + $0x188] sm:$0xff]
        %v271 = vld [vmem:[#allocation5 + $0x190] sm:$0xff]
        %v272 = vld [vmem:[#allocation5 + $0x198] sm:$0xff]
        %v273 = vld [vmem:[#allocation5 + $0x1a0] sm:$0xff]
        %v274 = vld [vmem:[#allocation5 + $0x1a8] sm:$0xff]
        %v275 = vld [vmem:[#allocation5 + $0x1b0] sm:$0xff]
        %v276 = vld [vmem:[#allocation5 + $0x1b8] sm:$0xff]
        %v277 = vld [vmem:[#allocation5 + $0x1c0] sm:$0xff]
        %v278 = vld [vmem:[#allocation5 + $0x1c8] sm:$0xff]
        %v279 = vld [vmem:[#allocation5 + $0x1d0] sm:$0xff]
        %v280 = vld [vmem:[#allocation5 + $0x1d8] sm:$0xff]
        %v281 = vld [vmem:[#allocation5 + $0x1e0] sm:$0xff]
        %v282 = vld [vmem:[#allocation5 + $0x1e8] sm:$0xff]
        %v283 = vld [vmem:[#allocation5 + $0x1f0] sm:$0xff]
        %v284 = vld [vmem:[#allocation5 + $0x1f8] sm:$0xff]
        %v287 = vunpack.c.l.b16 %v219
        %v288 = vunpack.c.h.b16 %v219
        %v289 = vunpack.c.l.b16 %v220
        %v290 = vunpack.c.h.b16 %v220
        %v291 = vpack.c.b16 %v289, %v287
        %v292 = vpack.c.b16 %v290, %v288
        %v359 = vunpack.c.l.b16 %v221
        %v360 = vunpack.c.h.b16 %v221
        %v361 = vunpack.c.l.b16 %v222
        %v362 = vunpack.c.h.b16 %v222
        %v363 = vunpack.c.l.b16 %v223
        %v364 = vunpack.c.h.b16 %v223
        %v365 = vunpack.c.l.b16 %v224
        %v366 = vunpack.c.h.b16 %v224
        %v367 = vunpack.c.l.b16 %v225
        %v368 = vunpack.c.h.b16 %v225
        %v369 = vunpack.c.l.b16 %v226
        %v370 = vunpack.c.h.b16 %v226
        %v371 = vunpack.c.l.b16 %v227
        %v372 = vunpack.c.h.b16 %v227
        %v373 = vunpack.c.l.b16 %v228
        %v374 = vunpack.c.h.b16 %v228
        %v375 = vunpack.c.l.b16 %v229
        %v376 = vunpack.c.h.b16 %v229
        %v377 = vunpack.c.l.b16 %v230
        %v378 = vunpack.c.h.b16 %v230
        %v379 = vunpack.c.l.b16 %v231
        %v380 = vunpack.c.h.b16 %v231
        %v381 = vunpack.c.l.b16 %v232
        %v382 = vunpack.c.h.b16 %v232
        %v383 = vunpack.c.l.b16 %v233
        %v384 = vunpack.c.h.b16 %v233
        %v385 = vunpack.c.l.b16 %v234
        %v386 = vunpack.c.h.b16 %v234
        %v387 = vunpack.c.l.b16 %v235
        %v388 = vunpack.c.h.b16 %v235
        %v389 = vunpack.c.l.b16 %v236
        %v390 = vunpack.c.h.b16 %v236
        %v391 = vunpack.c.l.b16 %v237
        %v392 = vunpack.c.h.b16 %v237
        %v393 = vunpack.c.l.b16 %v238
        %v394 = vunpack.c.h.b16 %v238
        %v395 = vunpack.c.l.b16 %v239
        %v396 = vunpack.c.h.b16 %v239
        %v397 = vunpack.c.l.b16 %v240
        %v398 = vunpack.c.h.b16 %v240
        %v399 = vunpack.c.l.b16 %v241
        %v400 = vunpack.c.h.b16 %v241
        %v401 = vunpack.c.l.b16 %v242
        %v402 = vunpack.c.h.b16 %v242
        %v403 = vunpack.c.l.b16 %v243
        %v404 = vunpack.c.h.b16 %v243
        %v405 = vunpack.c.l.b16 %v244
        %v406 = vunpack.c.h.b16 %v244
        %v407 = vunpack.c.l.b16 %v245
        %v408 = vunpack.c.h.b16 %v245
        %v409 = vunpack.c.l.b16 %v246
        %v410 = vunpack.c.h.b16 %v246
        %v411 = vunpack.c.l.b16 %v247
        %v412 = vunpack.c.h.b16 %v247
        %v413 = vunpack.c.l.b16 %v248
        %v414 = vunpack.c.h.b16 %v248
        %v415 = vunpack.c.l.b16 %v249
        %v416 = vunpack.c.h.b16 %v249
        %v417 = vunpack.c.l.b16 %v250
        %v418 = vunpack.c.h.b16 %v250
        %v419 = vunpack.c.l.b16 %v251
        %v420 = vunpack.c.h.b16 %v251
        %v421 = vunpack.c.l.b16 %v252
        %v422 = vunpack.c.h.b16 %v252
        %v423 = vunpack.c.l.b16 %v253
        %v424 = vunpack.c.h.b16 %v253
        %v425 = vunpack.c.l.b16 %v254
        %v426 = vunpack.c.h.b16 %v254
        %v427 = vunpack.c.l.b16 %v255
        %v428 = vunpack.c.h.b16 %v255
        %v429 = vunpack.c.l.b16 %v256
        %v430 = vunpack.c.h.b16 %v256
        %v431 = vunpack.c.l.b16 %v257
        %v432 = vunpack.c.h.b16 %v257
        %v433 = vunpack.c.l.b16 %v258
        %v434 = vunpack.c.h.b16 %v258
        %v435 = vunpack.c.l.b16 %v259
        %v436 = vunpack.c.h.b16 %v259
        %v437 = vunpack.c.l.b16 %v260
        %v438 = vunpack.c.h.b16 %v260
        %v439 = vunpack.c.l.b16 %v261
        %v440 = vunpack.c.h.b16 %v261
        %v441 = vunpack.c.l.b16 %v262
        %v442 = vunpack.c.h.b16 %v262
        %v443 = vunpack.c.l.b16 %v263
        %v444 = vunpack.c.h.b16 %v263
        %v445 = vunpack.c.l.b16 %v264
        %v446 = vunpack.c.h.b16 %v264
        %v447 = vunpack.c.l.b16 %v265
        %v448 = vunpack.c.h.b16 %v265
        %v449 = vunpack.c.l.b16 %v266
        %v450 = vunpack.c.h.b16 %v266
        %v451 = vunpack.c.l.b16 %v267
        %v452 = vunpack.c.h.b16 %v267
        %v453 = vunpack.c.l.b16 %v268
        %v454 = vunpack.c.h.b16 %v268
        %v455 = vunpack.c.l.b16 %v269
        %v456 = vunpack.c.h.b16 %v269
        %v457 = vunpack.c.l.b16 %v270
        %v458 = vunpack.c.h.b16 %v270
        %v459 = vunpack.c.l.b16 %v271
        %v460 = vunpack.c.h.b16 %v271
        %v461 = vunpack.c.l.b16 %v272
        %v462 = vunpack.c.h.b16 %v272
        %v463 = vunpack.c.l.b16 %v273
        %v464 = vunpack.c.h.b16 %v273
        %v465 = vunpack.c.l.b16 %v274
        %v466 = vunpack.c.h.b16 %v274
        %v467 = vunpack.c.l.b16 %v275
        %v468 = vunpack.c.h.b16 %v275
        %v469 = vunpack.c.l.b16 %v276
        %v470 = vunpack.c.h.b16 %v276
        %v471 = vunpack.c.l.b16 %v277
        %v472 = vunpack.c.h.b16 %v277
        %v473 = vunpack.c.l.b16 %v278
        %v474 = vunpack.c.h.b16 %v278
        %v475 = vunpack.c.l.b16 %v279
        %v476 = vunpack.c.h.b16 %v279
        %v477 = vunpack.c.l.b16 %v280
        %v478 = vunpack.c.h.b16 %v280
        %v479 = vunpack.c.l.b16 %v281
        %v480 = vunpack.c.h.b16 %v281
        %v481 = vunpack.c.l.b16 %v282
        %v482 = vunpack.c.h.b16 %v282
        %v483 = vunpack.c.l.b16 %v283
        %v484 = vunpack.c.h.b16 %v283
        %v485 = vunpack.c.l.b16 %v284
        %v486 = vunpack.c.h.b16 %v284
        %v487 = vpack.c.b16 %v363, %v359
        %v488 = vpack.c.b16 %v364, %v360
        %v489 = vpack.c.b16 %v365, %v361
        %v490 = vpack.c.b16 %v366, %v362
        %v491 = vpack.c.b16 %v371, %v367
        %v492 = vpack.c.b16 %v372, %v368
        %v493 = vpack.c.b16 %v373, %v369
        %v494 = vpack.c.b16 %v374, %v370
        %v495 = vpack.c.b16 %v379, %v375
        %v496 = vpack.c.b16 %v380, %v376
        %v497 = vpack.c.b16 %v381, %v377
        %v498 = vpack.c.b16 %v382, %v378
        %v499 = vpack.c.b16 %v387, %v383
        %v500 = vpack.c.b16 %v388, %v384
        %v501 = vpack.c.b16 %v389, %v385
        %v502 = vpack.c.b16 %v390, %v386
        %v503 = vpack.c.b16 %v395, %v391
        %v504 = vpack.c.b16 %v396, %v392
        %v505 = vpack.c.b16 %v397, %v393
        %v506 = vpack.c.b16 %v398, %v394
        %v507 = vpack.c.b16 %v403, %v399
        %v508 = vpack.c.b16 %v404, %v400
        %v509 = vpack.c.b16 %v405, %v401
        %v510 = vpack.c.b16 %v406, %v402
        %v511 = vpack.c.b16 %v411, %v407
        %v512 = vpack.c.b16 %v412, %v408
        %v513 = vpack.c.b16 %v413, %v409
        %v514 = vpack.c.b16 %v414, %v410
        %v515 = vpack.c.b16 %v419, %v415
        %v516 = vpack.c.b16 %v420, %v416
        %v517 = vpack.c.b16 %v421, %v417
        %v518 = vpack.c.b16 %v422, %v418
        %v519 = vpack.c.b16 %v427, %v423
        %v520 = vpack.c.b16 %v428, %v424
        %v521 = vpack.c.b16 %v429, %v425
        %v522 = vpack.c.b16 %v430, %v426
        %v523 = vpack.c.b16 %v435, %v431
        %v524 = vpack.c.b16 %v436, %v432
        %v525 = vpack.c.b16 %v437, %v433
        %v526 = vpack.c.b16 %v438, %v434
        %v527 = vpack.c.b16 %v443, %v439
        %v528 = vpack.c.b16 %v444, %v440
        %v529 = vpack.c.b16 %v445, %v441
        %v530 = vpack.c.b16 %v446, %v442
        %v531 = vpack.c.b16 %v451, %v447
        %v532 = vpack.c.b16 %v452, %v448
        %v533 = vpack.c.b16 %v453, %v449
        %v534 = vpack.c.b16 %v454, %v450
        %v535 = vpack.c.b16 %v459, %v455
        %v536 = vpack.c.b16 %v460, %v456
        %v537 = vpack.c.b16 %v461, %v457
        %v538 = vpack.c.b16 %v462, %v458
        %v539 = vpack.c.b16 %v467, %v463
        %v540 = vpack.c.b16 %v468, %v464
        %v541 = vpack.c.b16 %v469, %v465
        %v542 = vpack.c.b16 %v470, %v466
        %v543 = vpack.c.b16 %v475, %v471
        %v544 = vpack.c.b16 %v476, %v472
        %v545 = vpack.c.b16 %v477, %v473
        %v546 = vpack.c.b16 %v478, %v474
        %v547 = vpack.c.b16 %v483, %v479
        %v548 = vpack.c.b16 %v484, %v480
        %v549 = vpack.c.b16 %v485, %v481
        %v550 = vpack.c.b16 %v486, %v482
        %615 = vmatprep.subr.bf16.mxu0 %v488
        %616 = vmatpush1.bf16.msra.mxu0 %v487
        %617 = vmatprep.subr.bf16.mxu0 %v492
        %618 = vmatpush1.bf16.msra.mxu0 %v491
        %619 = vmatprep.subr.bf16.mxu0 %v496
        %620 = vmatpush1.bf16.msra.mxu0 %v495
        %621 = vmatprep.subr.bf16.mxu0 %v500
        %622 = vmatpush1.bf16.msra.mxu0 %v499
        %623 = vmatprep.subr.bf16.mxu0 %v504
        %624 = vmatpush1.bf16.msra.mxu0 %v503
        %625 = vmatprep.subr.bf16.mxu0 %v508
        %626 = vmatpush1.bf16.msra.mxu0 %v507
        %627 = vmatprep.subr.bf16.mxu0 %v512
        %628 = vmatpush1.bf16.msra.mxu0 %v511
        %629 = vmatprep.subr.bf16.mxu0 %v516
        %630 = vmatpush1.bf16.msra.mxu0 %v515
        %631 = vmatprep.subr.bf16.mxu0 %v520
        %632 = vmatpush1.bf16.msra.mxu0 %v519
        %633 = vmatprep.subr.bf16.mxu0 %v524
        %634 = vmatpush1.bf16.msra.mxu0 %v523
        %635 = vmatprep.subr.bf16.mxu0 %v528
        %636 = vmatpush1.bf16.msra.mxu0 %v527
        %637 = vmatprep.subr.bf16.mxu0 %v532
        %638 = vmatpush1.bf16.msra.mxu0 %v531
        %639 = vmatprep.subr.bf16.mxu0 %v536
        %640 = vmatpush1.bf16.msra.mxu0 %v535
        %641 = vmatprep.subr.bf16.mxu0 %v540
        %642 = vmatpush1.bf16.msra.mxu0 %v539
        %643 = vmatprep.subr.bf16.mxu0 %v544
        %644 = vmatpush1.bf16.msra.mxu0 %v543
        %645 = vmatprep.subr.bf16.mxu0 %v548
        %646 = vmatpush1.bf16.msra.mxu0 %v547
        %647 = vmatprep.mubr.bf16.mxu0 %v292
        %648 = vmatmul.mubr.bf16.gmra.mrb[0].mxu0 %v291
        %v649 = vpop.f32.mrb[0].mxu0
        %v650 = vadd.f32 0.0, %v649
        %v651 = vpop.f32.mrb[0].mxu0
        %v652 = vadd.f32 0.0, %v651
        %v653 = vpop.f32.mrb[0].mxu0
        %v654 = vadd.f32 0.0, %v653
        %v655 = vpop.f32.mrb[0].mxu0
        %v656 = vadd.f32 0.0, %v655
        %657 = vdwg.mxu0
        %658 = vmatprep.subr.bf16.mxu0 %v490
        %659 = vmatpush1.bf16.msra.mxu0 %v489
        %660 = vmatprep.subr.bf16.mxu0 %v494
        %661 = vmatpush1.bf16.msra.mxu0 %v493
        %662 = vmatprep.subr.bf16.mxu0 %v498
        %663 = vmatpush1.bf16.msra.mxu0 %v497
        %664 = vmatprep.subr.bf16.mxu0 %v502
        %665 = vmatpush1.bf16.msra.mxu0 %v501
        %666 = vmatprep.subr.bf16.mxu0 %v506
        %667 = vmatpush1.bf16.msra.mxu0 %v505
        %668 = vmatprep.subr.bf16.mxu0 %v510
        %669 = vmatpush1.bf16.msra.mxu0 %v509
        %670 = vmatprep.subr.bf16.mxu0 %v514
        %671 = vmatpush1.bf16.msra.mxu0 %v513
        %672 = vmatprep.subr.bf16.mxu0 %v518
        %673 = vmatpush1.bf16.msra.mxu0 %v517
        %674 = vmatprep.subr.bf16.mxu0 %v522
        %675 = vmatpush1.bf16.msra.mxu0 %v521
        %676 = vmatprep.subr.bf16.mxu0 %v526
        %677 = vmatpush1.bf16.msra.mxu0 %v525
        %678 = vmatprep.subr.bf16.mxu0 %v530
        %679 = vmatpush1.bf16.msra.mxu0 %v529
        %680 = vmatprep.subr.bf16.mxu0 %v534
        %681 = vmatpush1.bf16.msra.mxu0 %v533
        %682 = vmatprep.subr.bf16.mxu0 %v538
        %683 = vmatpush1.bf16.msra.mxu0 %v537
        %684 = vmatprep.subr.bf16.mxu0 %v542
        %685 = vmatpush1.bf16.msra.mxu0 %v541
        %686 = vmatprep.subr.bf16.mxu0 %v546
        %687 = vmatpush1.bf16.msra.mxu0 %v545
        %688 = vmatprep.subr.bf16.mxu0 %v550
        %689 = vmatpush1.bf16.msra.mxu0 %v549
        %690 = vmatprep.mubr.bf16.mxu0 %v292
        %691 = vmatmul.mubr.bf16.gmra.mrb[0].mxu0 %v291
        %v692 = vpop.f32.mrb[0].mxu0
        %v693 = vadd.f32 0.0, %v692
        %v694 = vpop.f32.mrb[0].mxu0
        %v695 = vadd.f32 0.0, %v694
        %v696 = vpop.f32.mrb[0].mxu0
        %v697 = vadd.f32 0.0, %v696
        %v698 = vpop.f32.mrb[0].mxu0
        %v699 = vadd.f32 0.0, %v698
        %700 = vdwg.mxu0
        %v701 = vlaneseq
        %v702 = vshrl.u32 %v701, 7
        %v703 = vadd.s32 %v702, 8
        %v704 = vlaneseq
        %v705 = vand.u32 %v704, 127
        %v706 = vmul.u32 %v705, 2
        %v707 = vsub.s32 %v702, %v706
        %v708 = vsub.s32 %v703, %v706
        %v709 = vadd.s32 %v707, 1
        %v710 = vadd.s32 %v708, 1
        %vm711 = vcmp.gt.s32.totalorder %v709, 0
        %v712 = vsel %vm711, %v709, 0
        %vm713 = vcmp.gt.s32.totalorder %v710, 0
        %v714 = vsel %vm713, %v710, 0
        %vm715 = vcmp.lt.s32.totalorder %v712, 2
        %v716 = vsel %vm715, %v712, 2
        %vm717 = vcmp.lt.s32.totalorder %v714, 2
        %v718 = vsel %vm717, %v714, 2
        %v719 = vcvt.s32.f32 %v716
        %v720 = vcvt.s32.f32 %v718
        %vm721 = vcmp.gt.f32.partialorder %v719, 0.0
        %vm722 = vcmp.gt.f32.partialorder %v720, 0.0
        %v723 = vpack.c.bf16 %v697, %v693
        %v724 = vpack.c.bf16 %v699, %v695
        %v725 = vpack.c.bf16 %v654, %v650
        %vm726 = vcmask 523264
        %v728 = vsel %vm726, %v725, 0
        %v731 = vsel %vm726, %v723, 0
        %733 = vmatprep.subr.bf16.mxu0 0
        %734 = vmatpush1.bf16.xpose.msra.mxu0 %v731
        %735 = vmatprep.subr.bf16.mxu0 0
        %736 = vmatpush1.bf16.xpose.msra.mxu0 0
        %737 = vmatprep.subr.bf16.mxu0 0
        %738 = vmatpush1.bf16.xpose.msra.mxu0 0
        %739 = vmatprep.subr.bf16.mxu0 0
        %740 = vmatpush1.bf16.xpose.msra.mxu0 0
        %741 = vmatprep.subr.bf16.mxu0 0
        %742 = vmatpush1.bf16.xpose.msra.mxu0 0
        %743 = vmatprep.subr.bf16.mxu0 0
        %744 = vmatpush1.bf16.xpose.msra.mxu0 0
        %745 = vmatprep.subr.bf16.mxu0 0
        %746 = vmatpush1.bf16.xpose.msra.mxu0 0
        %747 = vmatprep.subr.bf16.mxu0 0
        %748 = vmatpush1.bf16.xpose.msra.mxu0 0
        %749 = vmatprep.subr.bf16.mxu0 0
        %750 = vmatpush1.bf16.xpose.msra.mxu0 0
        %751 = vmatprep.subr.bf16.mxu0 0
        %752 = vmatpush1.bf16.xpose.msra.mxu0 0
        %753 = vmatprep.subr.bf16.mxu0 0
        %754 = vmatpush1.bf16.xpose.msra.mxu0 0
        %755 = vmatprep.subr.bf16.mxu0 0
        %756 = vmatpush1.bf16.xpose.msra.mxu0 0
        %757 = vmatprep.subr.bf16.mxu0 0
        %758 = vmatpush1.bf16.xpose.msra.mxu0 0
        %759 = vmatprep.subr.bf16.mxu0 0
        %760 = vmatpush1.bf16.xpose.msra.mxu0 0
        %761 = vmatprep.subr.bf16.mxu0 0
        %762 = vmatpush1.bf16.xpose.msra.mxu0 0
        %763 = vmatprep.subr.bf16.mxu0 0
        %764 = vmatpush1.bf16.xpose.msra.mxu0 0
        %765 = vmatprep.mubr.bf16.mxu0 0
        %766 = vmatmul.mubr.bf16.gmra.mrb[0].mxu0 %v728
        %v767 = vpop.f32.mrb[0].mxu0
        %v768 = vadd.f32 0.0, %v767
        %v769 = vpop.f32.mrb[0].mxu0
        %v770 = vpop.f32.mrb[0].mxu0
        %v771 = vadd.f32 0.0, %v770
        %v772 = vpop.f32.mrb[0].mxu0
        %773 = vdwg.mxu0
        %v774 = vsel %vm721, %v768, -1e+30
        %v775 = vsel %vm722, %v771, -1e+30
        %vm776 = vcmask 64512
        %v777 = vsel %vm776, %v774, -inf
        %778 = vmax.xlane.f32.xlu0 %v777
        %v779 = vpop.xlane.xlu0 %778
        %v780 = vsel %vm776, %v775, -inf
        %781 = vmax.xlane.f32.xlu0 %v780
        %v782 = vpop.xlane.xlu0 %781
        %v783 = vsub.f32 %v774, %v779
        %v784 = vsub.f32 %v775, %v782
        %v785 = vmul.f32 %v783, 1.442695
        %v786 = vpow.pop %v785
        %v787 = vmul.f32 %v784, 1.442695
        %v788 = vpow.pop %v787
        %v789 = vmul.f32 %v719, %v786
        %v790 = vmul.f32 %v720, %v788
        %v791 = vsel %vm776, %v789, 0.0
        %792 = vadd.xlane.f32.xlu0 %v791
        %v793 = vpop.xlane.xlu0 %792
        %v794 = vsel %vm776, %v790, 0.0
        %795 = vadd.xlane.f32.xlu0 %v794
        %v796 = vpop.xlane.xlu0 %795
        %v797 = vrcp.pop %v793
        %v798 = vrcp.pop %v796
        %v799 = vmul.f32 %v789, %v797
        %v800 = vmul.f32 %v790, %v798
        %v801 = vpack.c.bf16 %v800, %v799
        %v803 = vsel %vm776, %v801, 0
        %vm805 = vcmask 1043456
        %v807 = vsel %vm805, %v724, 0
        %809 = vmatprep.subr.bf16.mxu0 0
        %810 = vmatpush1.bf16.msra.mxu0 %v807
        %811 = vmatprep.subr.bf16.mxu0 0
        %812 = vmatpush1.bf16.msra.mxu0 0
        %813 = vmatprep.subr.bf16.mxu0 0
        %814 = vmatpush1.bf16.msra.mxu0 0
        %815 = vmatprep.subr.bf16.mxu0 0
        %816 = vmatpush1.bf16.msra.mxu0 0
        %817 = vmatprep.subr.bf16.mxu0 0
        %818 = vmatpush1.bf16.msra.mxu0 0
        %819 = vmatprep.subr.bf16.mxu0 0
        %820 = vmatpush1.bf16.msra.mxu0 0
        %821 = vmatprep.subr.bf16.mxu0 0
        %822 = vmatpush1.bf16.msra.mxu0 0
        %823 = vmatprep.subr.bf16.mxu0 0
        %824 = vmatpush1.bf16.msra.mxu0 0
        %825 = vmatprep.subr.bf16.mxu0 0
        %826 = vmatpush1.bf16.msra.mxu0 0
        %827 = vmatprep.subr.bf16.mxu0 0
        %828 = vmatpush1.bf16.msra.mxu0 0
        %829 = vmatprep.subr.bf16.mxu0 0
        %830 = vmatpush1.bf16.msra.mxu0 0
        %831 = vmatprep.subr.bf16.mxu0 0
        %832 = vmatpush1.bf16.msra.mxu0 0
        %833 = vmatprep.subr.bf16.mxu0 0
        %834 = vmatpush1.bf16.msra.mxu0 0
        %835 = vmatprep.subr.bf16.mxu0 0
        %836 = vmatpush1.bf16.msra.mxu0 0
        %837 = vmatprep.subr.bf16.mxu0 0
        %838 = vmatpush1.bf16.msra.mxu0 0
        %839 = vmatprep.subr.bf16.mxu0 0
        %840 = vmatpush1.bf16.msra.mxu0 0
        %841 = vmatprep.mubr.bf16.mxu0 0
        %842 = vmatmul.mubr.bf16.gmra.mrb[0].mxu0 %v803
        %v843 = vpop.f32.mrb[0].mxu0
        %v844 = vadd.f32 0.0, %v843
        %v845 = vpop.f32.mrb[0].mxu0
        %v846 = vpop.f32.mrb[0].mxu0
        %v847 = vadd.f32 0.0, %v846
        %v848 = vpop.f32.mrb[0].mxu0
        %849 = vdwg.mxu0
        %851 = vrot.lane.b32.xlu0 %v725, 64
        %v852 = vpop.permute.xlu0 %851
        %v854 = vrot.slane %v723, 4
        %v856 = vsel %vm726, %v852, 0
        %v859 = vsel %vm726, %v854, 0
        %861 = vmatprep.subr.bf16.mxu0 0
        %862 = vmatpush1.bf16.xpose.msra.mxu0 %v859
        %863 = vmatprep.subr.bf16.mxu0 0
        %864 = vmatpush1.bf16.xpose.msra.mxu0 0
        %865 = vmatprep.subr.bf16.mxu0 0
        %866 = vmatpush1.bf16.xpose.msra.mxu0 0
        %867 = vmatprep.subr.bf16.mxu0 0
        %868 = vmatpush1.bf16.xpose.msra.mxu0 0
        %869 = vmatprep.subr.bf16.mxu0 0
        %870 = vmatpush1.bf16.xpose.msra.mxu0 0
        %871 = vmatprep.subr.bf16.mxu0 0
        %872 = vmatpush1.bf16.xpose.msra.mxu0 0
        %873 = vmatprep.subr.bf16.mxu0 0
        %874 = vmatpush1.bf16.xpose.msra.mxu0 0
        %875 = vmatprep.subr.bf16.mxu0 0
        %876 = vmatpush1.bf16.xpose.msra.mxu0 0
        %877 = vmatprep.subr.bf16.mxu0 0
        %878 = vmatpush1.bf16.xpose.msra.mxu0 0
        %879 = vmatprep.subr.bf16.mxu0 0
        %880 = vmatpush1.bf16.xpose.msra.mxu0 0
        %881 = vmatprep.subr.bf16.mxu0 0
        %882 = vmatpush1.bf16.xpose.msra.mxu0 0
        %883 = vmatprep.subr.bf16.mxu0 0
        %884 = vmatpush1.bf16.xpose.msra.mxu0 0
        %885 = vmatprep.subr.bf16.mxu0 0
        %886 = vmatpush1.bf16.xpose.msra.mxu0 0
        %887 = vmatprep.subr.bf16.mxu0 0
        %888 = vmatpush1.bf16.xpose.msra.mxu0 0
        %889 = vmatprep.subr.bf16.mxu0 0
        %890 = vmatpush1.bf16.xpose.msra.mxu0 0
        %891 = vmatprep.subr.bf16.mxu0 0
        %892 = vmatpush1.bf16.xpose.msra.mxu0 0
        %893 = vmatprep.mubr.bf16.mxu0 0
        %894 = vmatmul.mubr.bf16.gmra.mrb[0].mxu0 %v856
        %v895 = vpop.f32.mrb[0].mxu0
        %v896 = vadd.f32 0.0, %v895
        %v897 = vpop.f32.mrb[0].mxu0
        %v898 = vpop.f32.mrb[0].mxu0
        %v899 = vadd.f32 0.0, %v898
        %v900 = vpop.f32.mrb[0].mxu0
        %901 = vdwg.mxu0
        %v902 = vsel %vm721, %v896, -1e+30
        %v903 = vsel %vm722, %v899, -1e+30
        %v904 = vsel %vm776, %v902, -inf
        %905 = vmax.xlane.f32.xlu0 %v904
        %v906 = vpop.xlane.xlu0 %905
        %v907 = vsel %vm776, %v903, -inf
        %908 = vmax.xlane.f32.xlu0 %v907
        %v909 = vpop.xlane.xlu0 %908
        %v910 = vsub.f32 %v902, %v906
        %v911 = vsub.f32 %v903, %v909
        %v912 = vmul.f32 %v910, 1.442695
        %v913 = vpow.pop %v912
        %v914 = vmul.f32 %v911, 1.442695
        %v915 = vpow.pop %v914
        %v916 = vmul.f32 %v719, %v913
        %v917 = vmul.f32 %v720, %v915
        %v918 = vsel %vm776, %v916, 0.0
        %919 = vadd.xlane.f32.xlu0 %v918
        %v920 = vpop.xlane.xlu0 %919
        %v921 = vsel %vm776, %v917, 0.0
        %922 = vadd.xlane.f32.xlu0 %v921
        %v923 = vpop.xlane.xlu0 %922
        %v924 = vrcp.pop %v920
        %v925 = vrcp.pop %v923
        %v926 = vmul.f32 %v916, %v924
        %v927 = vmul.f32 %v917, %v925
        %v928 = vpack.c.bf16 %v927, %v926
        %v930 = vrot.slane %v724, 4
        %v932 = vsel %vm776, %v928, 0
        %v935 = vsel %vm805, %v930, 0
        %937 = vmatprep.subr.bf16.mxu0 0
        %938 = vmatpush1.bf16.msra.mxu0 %v935
        %939 = vmatprep.subr.bf16.mxu0 0
        %940 = vmatpush1.bf16.msra.mxu0 0
        %941 = vmatprep.subr.bf16.mxu0 0
        %942 = vmatpush1.bf16.msra.mxu0 0
        %943 = vmatprep.subr.bf16.mxu0 0
        %944 = vmatpush1.bf16.msra.mxu0 0
        %945 = vmatprep.subr.bf16.mxu0 0
        %946 = vmatpush1.bf16.msra.mxu0 0
        %947 = vmatprep.subr.bf16.mxu0 0
        %948 = vmatpush1.bf16.msra.mxu0 0
        %949 = vmatprep.subr.bf16.mxu0 0
        %950 = vmatpush1.bf16.msra.mxu0 0
        %951 = vmatprep.subr.bf16.mxu0 0
        %952 = vmatpush1.bf16.msra.mxu0 0
        %953 = vmatprep.subr.bf16.mxu0 0
        %954 = vmatpush1.bf16.msra.mxu0 0
        %955 = vmatprep.subr.bf16.mxu0 0
        %956 = vmatpush1.bf16.msra.mxu0 0
        %957 = vmatprep.subr.bf16.mxu0 0
        %958 = vmatpush1.bf16.msra.mxu0 0
        %959 = vmatprep.subr.bf16.mxu0 0
        %960 = vmatpush1.bf16.msra.mxu0 0
        %961 = vmatprep.subr.bf16.mxu0 0
        %962 = vmatpush1.bf16.msra.mxu0 0
        %963 = vmatprep.subr.bf16.mxu0 0
        %964 = vmatpush1.bf16.msra.mxu0 0
        %965 = vmatprep.subr.bf16.mxu0 0
        %966 = vmatpush1.bf16.msra.mxu0 0
        %967 = vmatprep.subr.bf16.mxu0 0
        %968 = vmatpush1.bf16.msra.mxu0 0
        %969 = vmatprep.mubr.bf16.mxu0 0
        %970 = vmatmul.mubr.bf16.gmra.mrb[0].mxu0 %v932
        %v971 = vpop.f32.mrb[0].mxu0
        %v972 = vadd.f32 0.0, %v971
        %v973 = vpop.f32.mrb[0].mxu0
        %v974 = vpop.f32.mrb[0].mxu0
        %v975 = vadd.f32 0.0, %v974
        %v976 = vpop.f32.mrb[0].mxu0
        %977 = vdwg.mxu0
        %980 = vrot.lane.b32.xlu0 %v972, 64
        %v981 = vpop.permute.xlu0 %980
        %982 = vrot.lane.b32.xlu0 %v975, 64
        %v983 = vpop.permute.xlu0 %982
        %v986 = vsel %vm726, %v844, %v981
        %v987 = vsel %vm726, %v847, %v983
        %v988 = vpack.c.bf16 %v656, %v652
        %989 = vrot.lane.b32.xlu0 %v723, 64
        %v990 = vpop.permute.xlu0 %989
        %v992 = vsel %vm726, %v988, 0
        %v995 = vsel %vm726, %v990, 0
        %997 = vmatprep.subr.bf16.mxu0 0
        %998 = vmatpush1.bf16.xpose.msra.mxu0 %v995
        %999 = vmatprep.subr.bf16.mxu0 0
        %1000 = vmatpush1.bf16.xpose.msra.mxu0 0
        %1001 = vmatprep.subr.bf16.mxu0 0
        %1002 = vmatpush1.bf16.xpose.msra.mxu0 0
        %1003 = vmatprep.subr.bf16.mxu0 0
        %1004 = vmatpush1.bf16.xpose.msra.mxu0 0
        %1005 = vmatprep.subr.bf16.mxu0 0
        %1006 = vmatpush1.bf16.xpose.msra.mxu0 0
        %1007 = vmatprep.subr.bf16.mxu0 0
        %1008 = vmatpush1.bf16.xpose.msra.mxu0 0
        %1009 = vmatprep.subr.bf16.mxu0 0
        %1010 = vmatpush1.bf16.xpose.msra.mxu0 0
        %1011 = vmatprep.subr.bf16.mxu0 0
        %1012 = vmatpush1.bf16.xpose.msra.mxu0 0
        %1013 = vmatprep.subr.bf16.mxu0 0
        %1014 = vmatpush1.bf16.xpose.msra.mxu0 0
        %1015 = vmatprep.subr.bf16.mxu0 0
        %1016 = vmatpush1.bf16.xpose.msra.mxu0 0
        %1017 = vmatprep.subr.bf16.mxu0 0
        %1018 = vmatpush1.bf16.xpose.msra.mxu0 0
        %1019 = vmatprep.subr.bf16.mxu0 0
        %1020 = vmatpush1.bf16.xpose.msra.mxu0 0
        %1021 = vmatprep.subr.bf16.mxu0 0
        %1022 = vmatpush1.bf16.xpose.msra.mxu0 0
        %1023 = vmatprep.subr.bf16.mxu0 0
        %1024 = vmatpush1.bf16.xpose.msra.mxu0 0
        %1025 = vmatprep.subr.bf16.mxu0 0
        %1026 = vmatpush1.bf16.xpose.msra.mxu0 0
        %1027 = vmatprep.subr.bf16.mxu0 0
        %1028 = vmatpush1.bf16.xpose.msra.mxu0 0
        %1029 = vmatprep.mubr.bf16.mxu0 0
        %1030 = vmatmul.mubr.bf16.gmra.mrb[0].mxu0 %v992
        %v1031 = vpop.f32.mrb[0].mxu0
        %v1032 = vadd.f32 0.0, %v1031
        %v1033 = vpop.f32.mrb[0].mxu0
        %v1034 = vpop.f32.mrb[0].mxu0
        %v1035 = vadd.f32 0.0, %v1034
        %v1036 = vpop.f32.mrb[0].mxu0
        %1037 = vdwg.mxu0
        %v1038 = vsel %vm721, %v1032, -1e+30
        %v1039 = vsel %vm722, %v1035, -1e+30
        %v1040 = vsel %vm776, %v1038, -inf
        %1041 = vmax.xlane.f32.xlu0 %v1040
        %v1042 = vpop.xlane.xlu0 %1041
        %v1043 = vsel %vm776, %v1039, -inf
        %1044 = vmax.xlane.f32.xlu0 %v1043
        %v1045 = vpop.xlane.xlu0 %1044
        %v1046 = vsub.f32 %v1038, %v1042
        %v1047 = vsub.f32 %v1039, %v1045
        %v1048 = vmul.f32 %v1046, 1.442695
        %v1049 = vpow.pop %v1048
        %v1050 = vmul.f32 %v1047, 1.442695
        %v1051 = vpow.pop %v1050
        %v1052 = vmul.f32 %v719, %v1049
        %v1053 = vmul.f32 %v720, %v1051
        %v1054 = vsel %vm776, %v1052, 0.0
        %1055 = vadd.xlane.f32.xlu0 %v1054
        %v1056 = vpop.xlane.xlu0 %1055
        %v1057 = vsel %vm776, %v1053, 0.0
        %1058 = vadd.xlane.f32.xlu0 %v1057
        %v1059 = vpop.xlane.xlu0 %1058
        %v1060 = vrcp.pop %v1056
        %v1061 = vrcp.pop %v1059
        %v1062 = vmul.f32 %v1052, %v1060
        %v1063 = vmul.f32 %v1053, %v1061
        %v1064 = vpack.c.bf16 %v1063, %v1062
        %1065 = vrot.lane.b32.xlu0 %v724, 64
        %v1066 = vpop.permute.xlu0 %1065
        %v1068 = vsel %vm776, %v1064, 0
        %v1071 = vsel %vm805, %v1066, 0
        %1073 = vmatprep.subr.bf16.mxu0 0
        %1074 = vmatpush1.bf16.msra.mxu0 %v1071
        %1075 = vmatprep.subr.bf16.mxu0 0
        %1076 = vmatpush1.bf16.msra.mxu0 0
        %1077 = vmatprep.subr.bf16.mxu0 0
        %1078 = vmatpush1.bf16.msra.mxu0 0
        %1079 = vmatprep.subr.bf16.mxu0 0
        %1080 = vmatpush1.bf16.msra.mxu0 0
        %1081 = vmatprep.subr.bf16.mxu0 0
        %1082 = vmatpush1.bf16.msra.mxu0 0
        %1083 = vmatprep.subr.bf16.mxu0 0
        %1084 = vmatpush1.bf16.msra.mxu0 0
        %1085 = vmatprep.subr.bf16.mxu0 0
        %1086 = vmatpush1.bf16.msra.mxu0 0
        %1087 = vmatprep.subr.bf16.mxu0 0
        %1088 = vmatpush1.bf16.msra.mxu0 0
        %1089 = vmatprep.subr.bf16.mxu0 0
        %1090 = vmatpush1.bf16.msra.mxu0 0
        %1091 = vmatprep.subr.bf16.mxu0 0
        %1092 = vmatpush1.bf16.msra.mxu0 0
        %1093 = vmatprep.subr.bf16.mxu0 0
        %1094 = vmatpush1.bf16.msra.mxu0 0
        %1095 = vmatprep.subr.bf16.mxu0 0
        %1096 = vmatpush1.bf16.msra.mxu0 0
        %1097 = vmatprep.subr.bf16.mxu0 0
        %1098 = vmatpush1.bf16.msra.mxu0 0
        %1099 = vmatprep.subr.bf16.mxu0 0
        %1100 = vmatpush1.bf16.msra.mxu0 0
        %1101 = vmatprep.subr.bf16.mxu0 0
        %1102 = vmatpush1.bf16.msra.mxu0 0
        %1103 = vmatprep.subr.bf16.mxu0 0
        %1104 = vmatpush1.bf16.msra.mxu0 0
        %1105 = vmatprep.mubr.bf16.mxu0 0
        %1106 = vmatmul.mubr.bf16.gmra.mrb[0].mxu0 %v1068
        %v1107 = vpop.f32.mrb[0].mxu0
        %v1108 = vadd.f32 0.0, %v1107
        %v1109 = vpop.f32.mrb[0].mxu0
        %v1110 = vpop.f32.mrb[0].mxu0
        %v1111 = vadd.f32 0.0, %v1110
        %v1112 = vpop.f32.mrb[0].mxu0
        %1113 = vdwg.mxu0
        %1115 = vrot.lane.b32.xlu0 %v988, 64
        %v1116 = vpop.permute.xlu0 %1115
        %1117 = vrot.lane.b32.xlu0 %v854, 64
        %v1118 = vpop.permute.xlu0 %1117
        %v1120 = vsel %vm726, %v1116, 0
        %v1123 = vsel %vm726, %v1118, 0
        %1125 = vmatprep.subr.bf16.mxu0 0
        %1126 = vmatpush1.bf16.xpose.msra.mxu0 %v1123
        %1127 = vmatprep.subr.bf16.mxu0 0
        %1128 = vmatpush1.bf16.xpose.msra.mxu0 0
        %1129 = vmatprep.subr.bf16.mxu0 0
        %1130 = vmatpush1.bf16.xpose.msra.mxu0 0
        %1131 = vmatprep.subr.bf16.mxu0 0
        %1132 = vmatpush1.bf16.xpose.msra.mxu0 0
        %1133 = vmatprep.subr.bf16.mxu0 0
        %1134 = vmatpush1.bf16.xpose.msra.mxu0 0
        %1135 = vmatprep.subr.bf16.mxu0 0
        %1136 = vmatpush1.bf16.xpose.msra.mxu0 0
        %1137 = vmatprep.subr.bf16.mxu0 0
        %1138 = vmatpush1.bf16.xpose.msra.mxu0 0
        %1139 = vmatprep.subr.bf16.mxu0 0
        %1140 = vmatpush1.bf16.xpose.msra.mxu0 0
        %1141 = vmatprep.subr.bf16.mxu0 0
        %1142 = vmatpush1.bf16.xpose.msra.mxu0 0
        %1143 = vmatprep.subr.bf16.mxu0 0
        %1144 = vmatpush1.bf16.xpose.msra.mxu0 0
        %1145 = vmatprep.subr.bf16.mxu0 0
        %1146 = vmatpush1.bf16.xpose.msra.mxu0 0
        %1147 = vmatprep.subr.bf16.mxu0 0
        %1148 = vmatpush1.bf16.xpose.msra.mxu0 0
        %1149 = vmatprep.subr.bf16.mxu0 0
        %1150 = vmatpush1.bf16.xpose.msra.mxu0 0
        %1151 = vmatprep.subr.bf16.mxu0 0
        %1152 = vmatpush1.bf16.xpose.msra.mxu0 0
        %1153 = vmatprep.subr.bf16.mxu0 0
        %1154 = vmatpush1.bf16.xpose.msra.mxu0 0
        %1155 = vmatprep.subr.bf16.mxu0 0
        %1156 = vmatpush1.bf16.xpose.msra.mxu0 0
        %1157 = vmatprep.mubr.bf16.mxu0 0
        %1158 = vmatmul.mubr.bf16.gmra.mrb[0].mxu0 %v1120
        %v1159 = vpop.f32.mrb[0].mxu0
        %v1160 = vadd.f32 0.0, %v1159
        %v1161 = vpop.f32.mrb[0].mxu0
        %v1162 = vpop.f32.mrb[0].mxu0
        %v1163 = vadd.f32 0.0, %v1162
        %v1164 = vpop.f32.mrb[0].mxu0
        %1165 = vdwg.mxu0
        %v1166 = vsel %vm721, %v1160, -1e+30
        %v1167 = vsel %vm722, %v1163, -1e+30
        %v1168 = vsel %vm776, %v1166, -inf
        %1169 = vmax.xlane.f32.xlu0 %v1168
        %v1170 = vpop.xlane.xlu0 %1169
        %v1171 = vsel %vm776, %v1167, -inf
        %1172 = vmax.xlane.f32.xlu0 %v1171
        %v1173 = vpop.xlane.xlu0 %1172
        %v1174 = vsub.f32 %v1166, %v1170
        %v1175 = vsub.f32 %v1167, %v1173
        %v1176 = vmul.f32 %v1174, 1.442695
        %v1177 = vpow.pop %v1176
        %v1178 = vmul.f32 %v1175, 1.442695
        %v1179 = vpow.pop %v1178
        %v1180 = vmul.f32 %v719, %v1177
        %v1181 = vmul.f32 %v720, %v1179
        %v1182 = vsel %vm776, %v1180, 0.0
        %1183 = vadd.xlane.f32.xlu0 %v1182
        %v1184 = vpop.xlane.xlu0 %1183
        %v1185 = vsel %vm776, %v1181, 0.0
        %1186 = vadd.xlane.f32.xlu0 %v1185
        %v1187 = vpop.xlane.xlu0 %1186
        %v1188 = vrcp.pop %v1184
        %v1189 = vrcp.pop %v1187
        %v1190 = vmul.f32 %v1180, %v1188
        %v1191 = vmul.f32 %v1181, %v1189
        %v1192 = vpack.c.bf16 %v1191, %v1190
        %1193 = vrot.lane.b32.xlu0 %v930, 64
        %v1194 = vpop.permute.xlu0 %1193
        %v1196 = vsel %vm776, %v1192, 0
        %v1199 = vsel %vm805, %v1194, 0
        %1201 = vmatprep.subr.bf16.mxu0 0
        %1202 = vmatpush1.bf16.msra.mxu0 %v1199
        %1203 = vmatprep.subr.bf16.mxu0 0
        %1204 = vmatpush1.bf16.msra.mxu0 0
        %1205 = vmatprep.subr.bf16.mxu0 0
        %1206 = vmatpush1.bf16.msra.mxu0 0
        %1207 = vmatprep.subr.bf16.mxu0 0
        %1208 = vmatpush1.bf16.msra.mxu0 0
        %1209 = vmatprep.subr.bf16.mxu0 0
        %1210 = vmatpush1.bf16.msra.mxu0 0
        %1211 = vmatprep.subr.bf16.mxu0 0
        %1212 = vmatpush1.bf16.msra.mxu0 0
        %1213 = vmatprep.subr.bf16.mxu0 0
        %1214 = vmatpush1.bf16.msra.mxu0 0
        %1215 = vmatprep.subr.bf16.mxu0 0
        %1216 = vmatpush1.bf16.msra.mxu0 0
        %1217 = vmatprep.subr.bf16.mxu0 0
        %1218 = vmatpush1.bf16.msra.mxu0 0
        %1219 = vmatprep.subr.bf16.mxu0 0
        %1220 = vmatpush1.bf16.msra.mxu0 0
        %1221 = vmatprep.subr.bf16.mxu0 0
        %1222 = vmatpush1.bf16.msra.mxu0 0
        %1223 = vmatprep.subr.bf16.mxu0 0
        %1224 = vmatpush1.bf16.msra.mxu0 0
        %1225 = vmatprep.subr.bf16.mxu0 0
        %1226 = vmatpush1.bf16.msra.mxu0 0
        %1227 = vmatprep.subr.bf16.mxu0 0
        %1228 = vmatpush1.bf16.msra.mxu0 0
        %1229 = vmatprep.subr.bf16.mxu0 0
        %1230 = vmatpush1.bf16.msra.mxu0 0
        %1231 = vmatprep.subr.bf16.mxu0 0
        %1232 = vmatpush1.bf16.msra.mxu0 0
        %1233 = vmatprep.mubr.bf16.mxu0 0
        %1234 = vmatmul.mubr.bf16.gmra.mrb[0].mxu0 %v1196
        %v1235 = vpop.f32.mrb[0].mxu0
        %v1236 = vadd.f32 0.0, %v1235
        %v1237 = vpop.f32.mrb[0].mxu0
        %v1238 = vpop.f32.mrb[0].mxu0
        %v1239 = vadd.f32 0.0, %v1238
        %v1240 = vpop.f32.mrb[0].mxu0
        %1241 = vdwg.mxu0
        %1244 = vrot.lane.b32.xlu0 %v1236, 64
        %v1245 = vpop.permute.xlu0 %1244
        %1246 = vrot.lane.b32.xlu0 %v1239, 64
        %v1247 = vpop.permute.xlu0 %1246
        %v1250 = vsel %vm726, %v1108, %v1245
        %v1251 = vsel %vm726, %v1111, %v1247
        %v1252 = vpack.c.bf16 %v987, %v986
        %v1253 = vpack.c.bf16 %v1251, %v1250
        %v1254 = vld [vmem:[#allocation7] sm:$0xff]
        %v1255 = vld [vmem:[#allocation7 + $0x8] sm:$0xff]
        %v1256 = vld [vmem:[#allocation7 + $0x10] sm:$0xff]
        %v1257 = vld [vmem:[#allocation7 + $0x18] sm:$0xff]
        %v1258 = vld [vmem:[#allocation7 + $0x20] sm:$0xff]
        %v1259 = vld [vmem:[#allocation7 + $0x28] sm:$0xff]
        %v1260 = vld [vmem:[#allocation7 + $0x30] sm:$0xff]
        %v1261 = vld [vmem:[#allocation7 + $0x38] sm:$0xff]
        %v1262 = vld [vmem:[#allocation7 + $0x40] sm:$0xff]
        %v1263 = vld [vmem:[#allocation7 + $0x48] sm:$0xff]
        %v1264 = vld [vmem:[#allocation7 + $0x50] sm:$0xff]
        %v1265 = vld [vmem:[#allocation7 + $0x58] sm:$0xff]
        %v1266 = vld [vmem:[#allocation7 + $0x60] sm:$0xff]
        %v1267 = vld [vmem:[#allocation7 + $0x68] sm:$0xff]
        %v1268 = vld [vmem:[#allocation7 + $0x70] sm:$0xff]
        %v1269 = vld [vmem:[#allocation7 + $0x78] sm:$0xff]
        %v1270 = vld [vmem:[#allocation7 + $0x80] sm:$0xff]
        %v1271 = vld [vmem:[#allocation7 + $0x88] sm:$0xff]
        %v1272 = vld [vmem:[#allocation7 + $0x90] sm:$0xff]
        %v1273 = vld [vmem:[#allocation7 + $0x98] sm:$0xff]
        %v1274 = vld [vmem:[#allocation7 + $0xa0] sm:$0xff]
        %v1275 = vld [vmem:[#allocation7 + $0xa8] sm:$0xff]
        %v1276 = vld [vmem:[#allocation7 + $0xb0] sm:$0xff]
        %v1277 = vld [vmem:[#allocation7 + $0xb8] sm:$0xff]
        %v1278 = vld [vmem:[#allocation7 + $0xc0] sm:$0xff]
        %v1279 = vld [vmem:[#allocation7 + $0xc8] sm:$0xff]
        %v1280 = vld [vmem:[#allocation7 + $0xd0] sm:$0xff]
        %v1281 = vld [vmem:[#allocation7 + $0xd8] sm:$0xff]
        %v1282 = vld [vmem:[#allocation7 + $0xe0] sm:$0xff]
        %v1283 = vld [vmem:[#allocation7 + $0xe8] sm:$0xff]
        %v1284 = vld [vmem:[#allocation7 + $0xf0] sm:$0xff]
        %v1285 = vld [vmem:[#allocation7 + $0xf8] sm:$0xff]
        %v1318 = vunpack.c.l.b16 %v1254
        %v1319 = vunpack.c.h.b16 %v1254
        %v1320 = vunpack.c.l.b16 %v1255
        %v1321 = vunpack.c.h.b16 %v1255
        %v1322 = vunpack.c.l.b16 %v1256
        %v1323 = vunpack.c.h.b16 %v1256
        %v1324 = vunpack.c.l.b16 %v1257
        %v1325 = vunpack.c.h.b16 %v1257
        %v1326 = vunpack.c.l.b16 %v1258
        %v1327 = vunpack.c.h.b16 %v1258
        %v1328 = vunpack.c.l.b16 %v1259
        %v1329 = vunpack.c.h.b16 %v1259
        %v1330 = vunpack.c.l.b16 %v1260
        %v1331 = vunpack.c.h.b16 %v1260
        %v1332 = vunpack.c.l.b16 %v1261
        %v1333 = vunpack.c.h.b16 %v1261
        %v1334 = vunpack.c.l.b16 %v1262
        %v1335 = vunpack.c.h.b16 %v1262
        %v1336 = vunpack.c.l.b16 %v1263
        %v1337 = vunpack.c.h.b16 %v1263
        %v1338 = vunpack.c.l.b16 %v1264
        %v1339 = vunpack.c.h.b16 %v1264
        %v1340 = vunpack.c.l.b16 %v1265
        %v1341 = vunpack.c.h.b16 %v1265
        %v1342 = vunpack.c.l.b16 %v1266
        %v1343 = vunpack.c.h.b16 %v1266
        %v1344 = vunpack.c.l.b16 %v1267
        %v1345 = vunpack.c.h.b16 %v1267
        %v1346 = vunpack.c.l.b16 %v1268
        %v1347 = vunpack.c.h.b16 %v1268
        %v1348 = vunpack.c.l.b16 %v1269
        %v1349 = vunpack.c.h.b16 %v1269
        %v1350 = vunpack.c.l.b16 %v1270
        %v1351 = vunpack.c.h.b16 %v1270
        %v1352 = vunpack.c.l.b16 %v1271
        %v1353 = vunpack.c.h.b16 %v1271
        %v1354 = vunpack.c.l.b16 %v1272
        %v1355 = vunpack.c.h.b16 %v1272
        %v1356 = vunpack.c.l.b16 %v1273
        %v1357 = vunpack.c.h.b16 %v1273
        %v1358 = vunpack.c.l.b16 %v1274
        %v1359 = vunpack.c.h.b16 %v1274
        %v1360 = vunpack.c.l.b16 %v1275
        %v1361 = vunpack.c.h.b16 %v1275
        %v1362 = vunpack.c.l.b16 %v1276
        %v1363 = vunpack.c.h.b16 %v1276
        %v1364 = vunpack.c.l.b16 %v1277
        %v1365 = vunpack.c.h.b16 %v1277
        %v1366 = vunpack.c.l.b16 %v1278
        %v1367 = vunpack.c.h.b16 %v1278
        %v1368 = vunpack.c.l.b16 %v1279
        %v1369 = vunpack.c.h.b16 %v1279
        %v1370 = vunpack.c.l.b16 %v1280
        %v1371 = vunpack.c.h.b16 %v1280
        %v1372 = vunpack.c.l.b16 %v1281
        %v1373 = vunpack.c.h.b16 %v1281
        %v1374 = vunpack.c.l.b16 %v1282
        %v1375 = vunpack.c.h.b16 %v1282
        %v1376 = vunpack.c.l.b16 %v1283
        %v1377 = vunpack.c.h.b16 %v1283
        %v1378 = vunpack.c.l.b16 %v1284
        %v1379 = vunpack.c.h.b16 %v1284
        %v1380 = vunpack.c.l.b16 %v1285
        %v1381 = vunpack.c.h.b16 %v1285
        %v1382 = vpack.c.b16 %v1320, %v1318
        %v1383 = vpack.c.b16 %v1321, %v1319
        %v1384 = vpack.c.b16 %v1324, %v1322
        %v1385 = vpack.c.b16 %v1325, %v1323
        %v1386 = vpack.c.b16 %v1328, %v1326
        %v1387 = vpack.c.b16 %v1329, %v1327
        %v1388 = vpack.c.b16 %v1332, %v1330
        %v1389 = vpack.c.b16 %v1333, %v1331
        %v1390 = vpack.c.b16 %v1336, %v1334
        %v1391 = vpack.c.b16 %v1337, %v1335
        %v1392 = vpack.c.b16 %v1340, %v1338
        %v1393 = vpack.c.b16 %v1341, %v1339
        %v1394 = vpack.c.b16 %v1344, %v1342
        %v1395 = vpack.c.b16 %v1345, %v1343
        %v1396 = vpack.c.b16 %v1348, %v1346
        %v1397 = vpack.c.b16 %v1349, %v1347
        %v1398 = vpack.c.b16 %v1352, %v1350
        %v1399 = vpack.c.b16 %v1353, %v1351
        %v1400 = vpack.c.b16 %v1356, %v1354
        %v1401 = vpack.c.b16 %v1357, %v1355
        %v1402 = vpack.c.b16 %v1360, %v1358
        %v1403 = vpack.c.b16 %v1361, %v1359
        %v1404 = vpack.c.b16 %v1364, %v1362
        %v1405 = vpack.c.b16 %v1365, %v1363
        %v1406 = vpack.c.b16 %v1368, %v1366
        %v1407 = vpack.c.b16 %v1369, %v1367
        %v1408 = vpack.c.b16 %v1372, %v1370
        %v1409 = vpack.c.b16 %v1373, %v1371
        %v1410 = vpack.c.b16 %v1376, %v1374
        %v1411 = vpack.c.b16 %v1377, %v1375
        %v1412 = vpack.c.b16 %v1380, %v1378
        %v1413 = vpack.c.b16 %v1381, %v1379
        %1446 = vmatprep.subr.bf16.mxu0 %v1383
        %1447 = vmatpush1.bf16.msra.mxu0 %v1382
        %1448 = vmatprep.subr.bf16.mxu0 %v1385
        %1449 = vmatpush1.bf16.msra.mxu0 %v1384
        %1450 = vmatprep.subr.bf16.mxu0 %v1387
        %1451 = vmatpush1.bf16.msra.mxu0 %v1386
        %1452 = vmatprep.subr.bf16.mxu0 %v1389
        %1453 = vmatpush1.bf16.msra.mxu0 %v1388
        %1454 = vmatprep.subr.bf16.mxu0 %v1391
        %1455 = vmatpush1.bf16.msra.mxu0 %v1390
        %1456 = vmatprep.subr.bf16.mxu0 %v1393
        %1457 = vmatpush1.bf16.msra.mxu0 %v1392
        %1458 = vmatprep.subr.bf16.mxu0 %v1395
        %1459 = vmatpush1.bf16.msra.mxu0 %v1394
        %1460 = vmatprep.subr.bf16.mxu0 %v1397
        %1461 = vmatpush1.bf16.msra.mxu0 %v1396
        %1462 = vmatprep.subr.bf16.mxu0 %v1399
        %1463 = vmatpush1.bf16.msra.mxu0 %v1398
        %1464 = vmatprep.subr.bf16.mxu0 %v1401
        %1465 = vmatpush1.bf16.msra.mxu0 %v1400
        %1466 = vmatprep.subr.bf16.mxu0 %v1403
        %1467 = vmatpush1.bf16.msra.mxu0 %v1402
        %1468 = vmatprep.subr.bf16.mxu0 %v1405
        %1469 = vmatpush1.bf16.msra.mxu0 %v1404
        %1470 = vmatprep.subr.bf16.mxu0 %v1407
        %1471 = vmatpush1.bf16.msra.mxu0 %v1406
        %1472 = vmatprep.subr.bf16.mxu0 %v1409
        %1473 = vmatpush1.bf16.msra.mxu0 %v1408
        %1474 = vmatprep.subr.bf16.mxu0 %v1411
        %1475 = vmatpush1.bf16.msra.mxu0 %v1410
        %1476 = vmatprep.subr.bf16.mxu0 %v1413
        %1477 = vmatpush1.bf16.msra.mxu0 %v1412
        %1478 = vmatprep.mubr.bf16.mxu0 %v1253
        %1479 = vmatmul.mubr.bf16.gmra.mrb[0].mxu0 %v1252
        %v1480 = vpop.f32.mrb[0].mxu0
        %v1481 = vadd.f32 0.0, %v1480
        %v1482 = vpop.f32.mrb[0].mxu0
        %v1483 = vadd.f32 0.0, %v1482
        %v1484 = vpop.f32.mrb[0].mxu0
        %v1485 = vadd.f32 0.0, %v1484
        %v1486 = vpop.f32.mrb[0].mxu0
        %v1487 = vadd.f32 0.0, %v1486
        %1488 = vdwg.mxu0
        %1489 = vst [vmem:[%s217] sm:$0xff] %v1481
        %1490 = vst [vmem:[%s217 + $0x8] sm:$0xff] %v1483
        %1491 = vst [vmem:[%s217 + $0x10] sm:$0xff] %v1485
        %1492 = vst [vmem:[%s217 + $0x18] sm:$0xff] %v1487
        %s1493 = sand.u32 %s97, 1
        %s1494 = scalar_lea.sflag [#allocation4], %s1493
        %s1495 = sand.u32 %s97, 1
        %s1496 = smul.addr %s1495, 32
        %s1497 = scalar_lea.vmem [#allocation8], %s1496
        // Predicated region
        $region45: #{mha_forward.1} parent=31 // pred_check
          %p1498 = pneg %p107
        $region46: #{mha_forward.1} parent=31 // pred_check_branch
          %1500 = sbr.rel (%p1498) target = $region48
        $region47: #{mha_forward.1} parent=31 // pred_region
          %s1502 = ssub.s32 512, 512
          %1503 = vsyncadd %s1494, %s1502
          %s1504 = smul.addr %s21, 4
          %s1505 = smul.addr %s1504, 128
          %s1506 = scalar_lea.hbm %s3, %s1505
          %s1507 = sshll.u32 %s1497, 4
          %s1508 = int_to_ptr.vmem [resolvable:$true] %s1507
          %1513 = dma.vmem_to_hbm [thread:$0]  %s1508, 512, %s1506, %s1494, 256, 256, 16
        $region48: #{mha_forward.1} parent=31 // pred_fallthru
          _
      $region32: #{mha_forward.1} parent=5 // pred_fallthru
        _
      %p1514 = scmp.le.s32.totalorder 2, %s16
      // Predicated region
      $region49: #{mha_forward.1} parent=5 // pred_check
        %p1515 = pneg %p1514
      $region50: #{mha_forward.1} parent=5 // pred_check_branch
        %1517 = sbr.rel (%p1515) target = $region52
      $region51: #{mha_forward.1} parent=5 // pred_region
        %s1518 = ssub.s32 %s16, 2
        // Predicated region
        $region53: #{mha_forward.1} parent=51 // pred_check
          %p1519 = pneg %p113
        $region54: #{mha_forward.1} parent=51 // pred_check_branch
          %1521 = sbr.rel (%p1519) target = $region56
        $region55: #{mha_forward.1} parent=51 // pred_region
          %s1522 = sand.u32 %s98, 1
          %s1523 = scalar_lea.sflag [#allocation4], %s1522
          %s1524 = sand.u32 %s98, 1
          %s1525 = smul.addr %s1524, 32
          %s1526 = scalar_lea.vmem [#allocation8], %s1525
          %1527 = dma.done %s1523, 512
        $region56: #{mha_forward.1} parent=51 // pred_fallthru
          _
      $region52: #{mha_forward.1} parent=5 // pred_fallthru
        _
    $region6: #{mha_forward.1} parent=1 // loop_footer
      %s20 = sadd.s32 1, %s16
    $region7: #{mha_forward.1} parent=1 // loop_footer_branch
      %15 = sbr.rel target = $region3
    $region8: #{mha_forward.1} parent=1 // loop_exit
      _
    %1528 = vsyncpa [#allocation3], 1
    %s1529 = scalar_lea.sflag [#allocation3], 1
    %1530 = vsyncpa %s1529, 1
    %1531 = vsyncpa [#allocation6], 1
    %1532 = vsyncpa [#allocation4], 1
    %s1533 = scalar_lea.sflag [#allocation4], 1
    %1534 = vsyncpa %s1533, 1

</llo_original>
